<compile_context>
chip_gen: v6e
topology: v6e:2x2x1
jax: 0.10.0
libtpu: 0.0.40
codegen_flags: <defaults>
</compile_context>

<pallas_src>
import functools

import jax
import jax.numpy as jnp
import numpy as np
from jax.experimental import pallas as pl
from jax.experimental.pallas import tpu as pltpu


def _round_up(x: int, m: int) -> int:
    return (x + m - 1) // m * m


# ----------------------------------------------------------------------------- kernels
def _gcn_layer1_kernel(a_ref, x_ref, w0_ref, b0_ref, h0_ref, acc_ref):
    """h0 = relu((A @ X) @ W0 + b0); A@X accumulated over the K grid axis."""
    @pl.when(pl.program_id(1) == 0)
    def _init():
        acc_ref[...] = jnp.zeros_like(acc_ref)

    # bf16 x bf16 -> f32 accumulate on the MXU.
    acc_ref[...] += jnp.dot(a_ref[...], x_ref[...],
                            preferred_element_type=jnp.float32)

    @pl.when(pl.program_id(1) == pl.num_programs(1) - 1)
    def _finalize():
        # Small (tile,F)@(F,H) projection kept in f32 (negligible cost).
        h = jnp.dot(acc_ref[...], w0_ref[...],
                    preferred_element_type=jnp.float32) + b0_ref[...]
        h0_ref[...] = jnp.maximum(h, 0.0).astype(h0_ref.dtype)


def _gcn_layer2_kernel(a_ref, h0_ref, w1_ref, b1_ref, eps_ref, z_ref, acc_ref):
    """z = mu + eps * exp(log_sig), with mu/log_sig from one fused (H,2E) projection."""
    @pl.when(pl.program_id(1) == 0)
    def _init():
        acc_ref[...] = jnp.zeros_like(acc_ref)

    acc_ref[...] += jnp.dot(a_ref[...], h0_ref[...],
                            preferred_element_type=jnp.float32)

    @pl.when(pl.program_id(1) == pl.num_programs(1) - 1)
    def _finalize():
        proj = jnp.dot(acc_ref[...], w1_ref[...],
                       preferred_element_type=jnp.float32) + b1_ref[...]
        e = proj.shape[-1] // 2
        mu = proj[:, :e]
        sigma = jnp.exp(proj[:, e:])                # EUP
        z = mu + eps_ref[...] * sigma               # f32 elementwise (VPU)
        z_ref[...] = z.astype(z_ref.dtype)          # stored bf16 for the decoder MXU


def _decoder_kernel(z_row_ref, z_col_ref, xhat_ref):
    """x_hat tile = sigmoid(z_row @ z_col^T) without materializing a transpose."""
    logits = jax.lax.dot_general(
        z_row_ref[...], z_col_ref[...],
        dimension_numbers=(((1,), (1,)), ((), ())),
        preferred_element_type=jnp.float32)
    xhat_ref[...] = jax.nn.sigmoid(logits)


# ----------------------------------------------------------------------------- wrapper
@functools.partial(jax.jit, static_argnames=("tile",))
def vgae_forward(adjacency, norm_adj, x_features, params, eps, *, tile=256):
    # `adjacency` is accepted for API parity with the PyTorch module but unused
    # in its forward pass (only norm_adj is used).
    del adjacency
    w0, b0, w1mu, b1mu, w1sig, b1sig = params

    N = norm_adj.shape[0]
    F = x_features.shape[1]
    H = w0.shape[1]
    E = w1mu.shape[1]

    f32, bf16 = jnp.float32, jnp.bfloat16

    # Fuse the mu / sigma projections into a single (H, 2E) matmul.
    w1 = jnp.concatenate([w1mu, w1sig], axis=1).astype(f32)                  # (H, 2E)
    b1 = jnp.concatenate([jnp.reshape(b1mu, (1, E)),
                          jnp.reshape(b1sig, (1, E))], axis=1).astype(f32)   # (1, 2E)
    b0r = jnp.reshape(b0, (1, H)).astype(f32)
    w0f = w0.astype(f32)

    # Lane-aligned tiling: pad N so row / column / output tiles divide evenly.
    tile = min(tile, _round_up(N, 128))
    n_pad = _round_up(N, tile)
    g = n_pad // tile

    # Large MXU operands go to HBM in bf16 (halves A's traffic; it is streamed
    # once per encoder pass -- the second pass needs the *complete* h0, so a
    # single-pass reuse of A row tiles is not possible).  Zero padding keeps the
    # real rows/cols uncontaminated (padded A rows/cols are all zero).
    a_bf = jnp.pad(norm_adj.astype(bf16), ((0, n_pad - N), (0, n_pad - N)))
    x_bf = jnp.pad(x_features.astype(bf16), ((0, n_pad - N), (0, 0)))
    eps_p = jnp.pad(eps.astype(f32), ((0, n_pad - N), (0, 0)))

    # Explicit scoped-VMEM limit with headroom (safe on v5e/v6e/v7x).
    vmem_limit = int(min(48 << 20, max(16 << 20, 8 * tile * tile * 4)))

    enc_params = pltpu.CompilerParams(
        dimension_semantics=("parallel", "arbitrary"),
        vmem_limit_bytes=vmem_limit)
    dec_params = pltpu.CompilerParams(
        dimension_semantics=("parallel", "parallel"),
        vmem_limit_bytes=vmem_limit)

    # ---- GCN layer 1: h0 = relu((A @ X) @ W0 + b0) ---------------------------------
    h0 = pl.pallas_call(
        _gcn_layer1_kernel,
        out_shape=jax.ShapeDtypeStruct((n_pad, H), bf16),
        grid_spec=pltpu.PrefetchScalarGridSpec(
            num_scalar_prefetch=0,
            grid=(g, g),
            in_specs=[
                pl.BlockSpec((tile, tile), lambda i, k: (i, k)),   # A tile
                pl.BlockSpec((tile, F), lambda i, k: (k, 0)),      # X K-slab
                pl.BlockSpec((F, H), lambda i, k: (0, 0)),         # W0 (whole)
                pl.BlockSpec((1, H), lambda i, k: (0, 0)),         # b0 (whole)
            ],
            out_specs=pl.BlockSpec((tile, H), lambda i, k: (i, 0)),
            scratch_shapes=[pltpu.VMEM((tile, F), jnp.float32)],   # A@X accumulator
        ),
        compiler_params=enc_params,
    )(a_bf, x_bf, w0f, b0r)

    # ---- GCN layer 2 + reparameterization: z = mu + eps * exp(log_sigma) -----------
    z = pl.pallas_call(
        _gcn_layer2_kernel,
        out_shape=jax.ShapeDtypeStruct((n_pad, E), bf16),
        grid_spec=pltpu.PrefetchScalarGridSpec(
            num_scalar_prefetch=0,
            grid=(g, g),
            in_specs=[
                pl.BlockSpec((tile, tile), lambda i, k: (i, k)),   # A tile
                pl.BlockSpec((tile, H), lambda i, k: (k, 0)),      # h0 K-slab
                pl.BlockSpec((H, 2 * E), lambda i, k: (0, 0)),     # fused W1
                pl.BlockSpec((1, 2 * E), lambda i, k: (0, 0)),     # fused b1
                pl.BlockSpec((tile, E), lambda i, k: (i, 0)),      # eps row tile
            ],
            out_specs=pl.BlockSpec((tile, E), lambda i, k: (i, 0)),
            scratch_shapes=[pltpu.VMEM((tile, H), jnp.float32)],   # A@h0 accumulator
        ),
        compiler_params=enc_params,
    )(a_bf, h0, w1, b1, eps_p)

    # ---- Decoder: x_hat = sigmoid(z @ z.T), tiled over a 2-D parallel grid ---------
    xhat_pad = pl.pallas_call(
        _decoder_kernel,
        out_shape=jax.ShapeDtypeStruct((n_pad, n_pad), jnp.float32),
        grid_spec=pltpu.PrefetchScalarGridSpec(
            num_scalar_prefetch=0,
            grid=(g, g),
            in_specs=[
                pl.BlockSpec((tile, E), lambda i, j: (i, 0)),      # z row tile
                pl.BlockSpec((tile, E), lambda i, j: (j, 0)),      # z col tile
            ],
            out_specs=pl.BlockSpec((tile, tile), lambda i, j: (i, j)),
        ),
        compiler_params=dec_params,
    )(z, z)

    return xhat_pad[:N, :N]


# ----------------------------------------------------------------------------- params
def init_params(key, num_features, num_neurons, embedding_size):
    """Glorot-uniform weights + constant-0.01 biases (mirrors the PyTorch __init__)."""
    k0, k1, k2 = jax.random.split(key, 3)

    def glorot(k, din, dout):
        r = np.sqrt(6.0 / (din + dout))
        return jax.random.uniform(k, (din, dout), jnp.float32, -r, r)

    w0 = glorot(k0, num_features, num_neurons)
    b0 = jnp.full((1, num_neurons), 0.01, jnp.float32)
    w1mu = glorot(k1, num_neurons, embedding_size)
    b1mu = jnp.full((1, embedding_size), 0.01, jnp.float32)
    w1sig = glorot(k2, num_neurons, embedding_size)
    b1sig = jnp.full((1, embedding_size), 0.01, jnp.float32)
    return (w0, b0, w1mu, b1mu, w1sig, b1sig)


if __name__ == "__main__":
    # Small deterministic problem: N=16 nodes, F=8 features, H=32 neurons, E=16 embedding.
    N, F, H, E = 16, 8, 32, 16
    key = jax.random.PRNGKey(0)
    k_adj, k_feat, k_param, k_eps = jax.random.split(key, 4)

    # Random symmetric adjacency with self-loops, symmetrically normalized.
    a = (jax.random.uniform(k_adj, (N, N)) > 0.7).astype(jnp.float32)
    adjacency = jnp.maximum(a, a.T)
    adjacency = jnp.maximum(adjacency, jnp.eye(N, dtype=jnp.float32))
    deg = jnp.sum(adjacency, axis=1)
    d_inv_sqrt = 1.0 / jnp.sqrt(deg)
    norm_adj = adjacency * d_inv_sqrt[:, None] * d_inv_sqrt[None, :]

    x_features = jax.random.normal(k_feat, (N, F), jnp.float32)
    params = init_params(k_param, F, H, E)
    # TODO(synk): torch.randn inside forward() has no in-kernel equivalent here; the
    # reparameterization noise is an explicit pre-sampled input instead.
    eps = jax.random.normal(k_eps, (N, E), jnp.float32)

    x_hat = vgae_forward(adjacency, norm_adj, x_features, params, eps)
    x_hat = jax.block_until_ready(x_hat)

    # Reference in plain JAX with the same bf16-operand / f32-accumulate recipe.
    w0, b0, w1mu, b1mu, w1sig, b1sig = params
    a_bf = norm_adj.astype(jnp.bfloat16)
    x_bf = x_features.astype(jnp.bfloat16)
    ax = jnp.dot(a_bf, x_bf, preferred_element_type=jnp.float32)
    h0 = jnp.maximum(jnp.dot(ax, w0, preferred_element_type=jnp.float32) + b0, 0.0)
    ah = jnp.dot(a_bf, h0.astype(jnp.bfloat16), preferred_element_type=jnp.float32)
    mu = jnp.dot(ah, w1mu, preferred_element_type=jnp.float32) + b1mu
    sig = jnp.exp(jnp.dot(ah, w1sig, preferred_element_type=jnp.float32) + b1sig)
    z_ref = (mu + eps * sig).astype(jnp.bfloat16)
    logits = jax.lax.dot_general(z_ref, z_ref, (((1,), (1,)), ((), ())),
                                 preferred_element_type=jnp.float32)
    ref = jax.nn.sigmoid(logits)

    assert x_hat.shape == (N, N)
    np.testing.assert_allclose(np.asarray(x_hat), np.asarray(ref), rtol=2e-2, atol=2e-2)

    print("KERNEL_OK")
</pallas_src>

<mosaic_0001>
module attributes {stable_mosaic.version = 11 : i64} {
  func.func @_gcn_layer2_kernel(%arg0: i32, %arg1: i32, %arg2: memref<128x128xbf16, #tpu.memory_space<vmem>>, %arg3: memref<128x32xbf16, #tpu.memory_space<vmem>>, %arg4: memref<32x32xf32, #tpu.memory_space<vmem>>, %arg5: memref<1x32xf32, #tpu.memory_space<vmem>>, %arg6: memref<128x16xf32, #tpu.memory_space<vmem>>, %arg7: memref<128x16xbf16, #tpu.memory_space<vmem>>, %arg8: memref<128x32xf32, #tpu.memory_space<vmem>>) attributes {dimension_semantics = [#tpu.dimension_semantics<parallel>, #tpu.dimension_semantics<arbitrary>], iteration_bounds = array<i64: 1, 1>, scalar_prefetch = 0 : i64, scratch_operands = 1 : i64, tpu.core_type = #tpu.core_type<tc>, window_params = [{transform_indices = @transform_0, window_bounds = array<i64: 128, 128>}, {transform_indices = @transform_1, window_bounds = array<i64: 128, 32>}, {pipeline_mode = #tpu.pipeline_mode<synchronous>, transform_indices = @transform_2, window_bounds = array<i64: 32, 32>}, {pipeline_mode = #tpu.pipeline_mode<synchronous>, transform_indices = @transform_3, window_bounds = array<i64: 1, 32>}, {transform_indices = @transform_4, window_bounds = array<i64: 128, 16>}, {transform_indices = @transform_5, window_bounds = array<i64: 128, 16>}]} {
    %c0_i32 = arith.constant 0 : i32
    %0 = arith.cmpi eq, %arg1, %c0_i32 : i32
    %1 = arith.extui %0 : i1 to i32
    %c0_i32_0 = arith.constant 0 : i32
    %2 = arith.cmpi ne, %1, %c0_i32_0 : i32
    scf.if %2 {
      %cst_10 = arith.constant 0.000000e+00 : f32
      %12 = vector.broadcast %cst_10 : f32 to vector<128x32xf32>
      %c0_11 = arith.constant 0 : index
      %c0_12 = arith.constant 0 : index
      %13 = vector.load %arg8[%c0_11, %c0_12] : memref<128x32xf32, #tpu.memory_space<vmem>>, vector<128x32xf32>
      tpu.vector_store %arg8[%c0_11, %c0_12], %12 {strides = array<i32>} : memref<128x32xf32, #tpu.memory_space<vmem>>, vector<128x32xf32>,
    } else {
    }
    %c0 = arith.constant 0 : index
    %c0_1 = arith.constant 0 : index
    %3 = vector.load %arg8[%c0, %c0_1] : memref<128x32xf32, #tpu.memory_space<vmem>>, vector<128x32xf32>
    %c0_2 = arith.constant 0 : index
    %c0_3 = arith.constant 0 : index
    %4 = vector.load %arg2[%c0_2, %c0_3] : memref<128x128xbf16, #tpu.memory_space<vmem>>, vector<128x128xbf16>
    %c0_4 = arith.constant 0 : index
    %c0_5 = arith.constant 0 : index
    %5 = vector.load %arg3[%c0_4, %c0_5] : memref<128x32xbf16, #tpu.memory_space<vmem>>, vector<128x32xbf16>
    %cst = arith.constant dense<0.000000e+00> : vector<128x32xf32>
    %6 = tpu.matmul %4, %5, %cst {dimension_numbers = #tpu.dot_dimension_numbers<[1], [0], [0], [1], [0, 0, 1, 1], [], []>} : vector<128x128xbf16>, vector<128x32xbf16>, vector<128x32xf32> -> vector<128x32xf32>
    %7 = arith.addf %3, %6 : vector<128x32xf32>
    %c0_6 = arith.constant 0 : index
    %c0_7 = arith.constant 0 : index
    %8 = vector.load %arg8[%c0_6, %c0_7] : memref<128x32xf32, #tpu.memory_space<vmem>>, vector<128x32xf32>
    tpu.vector_store %arg8[%c0_6, %c0_7], %7 {strides = array<i32>} : memref<128x32xf32, #tpu.memory_space<vmem>>, vector<128x32xf32>,
    %c0_i32_8 = arith.constant 0 : i32
    %9 = arith.cmpi eq, %arg1, %c0_i32_8 : i32
    %10 = arith.extui %9 : i1 to i32
    %c0_i32_9 = arith.constant 0 : i32
    %11 = arith.cmpi ne, %10, %c0_i32_9 : i32
    scf.if %11 {
      %c0_10 = arith.constant 0 : index
      %c0_11 = arith.constant 0 : index
      %12 = vector.load %arg8[%c0_10, %c0_11] : memref<128x32xf32, #tpu.memory_space<vmem>>, vector<128x32xf32>
      %c0_12 = arith.constant 0 : index
      %c0_13 = arith.constant 0 : index
      %13 = vector.load %arg4[%c0_12, %c0_13] : memref<32x32xf32, #tpu.memory_space<vmem>>, vector<32x32xf32>
      %cst_14 = arith.constant dense<0.000000e+00> : vector<128x32xf32>
      %14 = tpu.matmul %12, %13, %cst_14 {dimension_numbers = #tpu.dot_dimension_numbers<[1], [0], [0], [1], [0, 0, 1, 1], [], []>} : vector<128x32xf32>, vector<32x32xf32>, vector<128x32xf32> -> vector<128x32xf32>
      %c0_15 = arith.constant 0 : index
      %c0_16 = arith.constant 0 : index
      %15 = vector.load %arg5[%c0_15, %c0_16] : memref<1x32xf32, #tpu.memory_space<vmem>>, vector<1x32xf32>
      %16 = vector.broadcast %15 : vector<1x32xf32> to vector<128x32xf32>
      %17 = arith.addf %14, %16 : vector<128x32xf32>
      %18 = vector.extract_strided_slice %17 {offsets = [0, 0], sizes = [128, 16], strides = [1, 1]} : vector<128x32xf32> to vector<128x16xf32>
      %19 = vector.extract_strided_slice %17 {offsets = [0, 16], sizes = [128, 16], strides = [1, 1]} : vector<128x32xf32> to vector<128x16xf32>
      %20 = math.exp %19 : vector<128x16xf32>
      %c0_17 = arith.constant 0 : index
      %c0_18 = arith.constant 0 : index
      %21 = vector.load %arg6[%c0_17, %c0_18] : memref<128x16xf32, #tpu.memory_space<vmem>>, vector<128x16xf32>
      %22 = arith.mulf %21, %20 : vector<128x16xf32>
      %23 = arith.addf %18, %22 : vector<128x16xf32>
      %24 = arith.truncf %23 : vector<128x16xf32> to vector<128x16xbf16>
      %c0_19 = arith.constant 0 : index
      %c0_20 = arith.constant 0 : index
      %25 = vector.load %arg7[%c0_19, %c0_20] : memref<128x16xbf16, #tpu.memory_space<vmem>>, vector<128x16xbf16>
      tpu.vector_store %arg7[%c0_19, %c0_20], %24 {strides = array<i32>} : memref<128x16xbf16, #tpu.memory_space<vmem>>, vector<128x16xbf16>,
    } else {
    }
    return
  }
  func.func @transform_0(%arg0: i32, %arg1: i32) -> (i32, i32) {
    %c0_i32 = arith.constant 0 : i32
    return %arg0, %arg1 : i32, i32
  }
  func.func @transform_1(%arg0: i32, %arg1: i32) -> (i32, i32) {
    %c0_i32 = arith.constant 0 : i32
    %c0_i32_0 = arith.constant 0 : i32
    return %arg1, %c0_i32 : i32, i32
  }
  func.func @transform_2(%arg0: i32, %arg1: i32) -> (i32, i32) {
    %c0_i32 = arith.constant 0 : i32
    %c0_i32_0 = arith.constant 0 : i32
    %c0_i32_1 = arith.constant 0 : i32
    return %c0_i32, %c0_i32_0 : i32, i32
  }
  func.func @transform_3(%arg0: i32, %arg1: i32) -> (i32, i32) {
    %c0_i32 = arith.constant 0 : i32
    %c0_i32_0 = arith.constant 0 : i32
    %c0_i32_1 = arith.constant 0 : i32
    return %c0_i32, %c0_i32_0 : i32, i32
  }
  func.func @transform_4(%arg0: i32, %arg1: i32) -> (i32, i32) {
    %c0_i32 = arith.constant 0 : i32
    %c0_i32_0 = arith.constant 0 : i32
    return %arg0, %c0_i32 : i32, i32
  }
  func.func @transform_5(%arg0: i32, %arg1: i32) -> (i32, i32) {
    %c0_i32 = arith.constant 0 : i32
    %c0_i32_0 = arith.constant 0 : i32
    return %arg0, %c0_i32 : i32, i32
  }
}

module attributes {stable_mosaic.version = 11 : i64} {
  func.func @_gcn_layer1_kernel(%arg0: i32, %arg1: i32, %arg2: memref<128x128xbf16, #tpu.memory_space<vmem>>, %arg3: memref<128x8xbf16, #tpu.memory_space<vmem>>, %arg4: memref<8x32xf32, #tpu.memory_space<vmem>>, %arg5: memref<1x32xf32, #tpu.memory_space<vmem>>, %arg6: memref<128x32xbf16, #tpu.memory_space<vmem>>, %arg7: memref<128x8xf32, #tpu.memory_space<vmem>>) attributes {dimension_semantics = [#tpu.dimension_semantics<parallel>, #tpu.dimension_semantics<arbitrary>], iteration_bounds = array<i64: 1, 1>, scalar_prefetch = 0 : i64, scratch_operands = 1 : i64, tpu.core_type = #tpu.core_type<tc>, window_params = [{transform_indices = @transform_0, window_bounds = array<i64: 128, 128>}, {transform_indices = @transform_1, window_bounds = array<i64: 128, 8>}, {pipeline_mode = #tpu.pipeline_mode<synchronous>, transform_indices = @transform_2, window_bounds = array<i64: 8, 32>}, {pipeline_mode = #tpu.pipeline_mode<synchronous>, transform_indices = @transform_3, window_bounds = array<i64: 1, 32>}, {transform_indices = @transform_4, window_bounds = array<i64: 128, 32>}]} {
    %c0_i32 = arith.constant 0 : i32
    %0 = arith.cmpi eq, %arg1, %c0_i32 : i32
    %1 = arith.extui %0 : i1 to i32
    %c0_i32_0 = arith.constant 0 : i32
    %2 = arith.cmpi ne, %1, %c0_i32_0 : i32
    scf.if %2 {
      %cst_10 = arith.constant 0.000000e+00 : f32
      %12 = vector.broadcast %cst_10 : f32 to vector<128x8xf32>
      %c0_11 = arith.constant 0 : index
      %c0_12 = arith.constant 0 : index
      %13 = vector.load %arg7[%c0_11, %c0_12] : memref<128x8xf32, #tpu.memory_space<vmem>>, vector<128x8xf32>
      tpu.vector_store %arg7[%c0_11, %c0_12], %12 {strides = array<i32>} : memref<128x8xf32, #tpu.memory_space<vmem>>, vector<128x8xf32>,
    } else {
    }
    %c0 = arith.constant 0 : index
    %c0_1 = arith.constant 0 : index
    %3 = vector.load %arg7[%c0, %c0_1] : memref<128x8xf32, #tpu.memory_space<vmem>>, vector<128x8xf32>
    %c0_2 = arith.constant 0 : index
    %c0_3 = arith.constant 0 : index
    %4 = vector.load %arg2[%c0_2, %c0_3] : memref<128x128xbf16, #tpu.memory_space<vmem>>, vector<128x128xbf16>
    %c0_4 = arith.constant 0 : index
    %c0_5 = arith.constant 0 : index
    %5 = vector.load %arg3[%c0_4, %c0_5] : memref<128x8xbf16, #tpu.memory_space<vmem>>, vector<128x8xbf16>
    %cst = arith.constant dense<0.000000e+00> : vector<128x8xf32>
    %6 = tpu.matmul %4, %5, %cst {dimension_numbers = #tpu.dot_dimension_numbers<[1], [0], [0], [1], [0, 0, 1, 1], [], []>} : vector<128x128xbf16>, vector<128x8xbf16>, vector<128x8xf32> -> vector<128x8xf32>
    %7 = arith.addf %3, %6 : vector<128x8xf32>
    %c0_6 = arith.constant 0 : index
    %c0_7 = arith.constant 0 : index
    %8 = vector.load %arg7[%c0_6, %c0_7] : memref<128x8xf32, #tpu.memory_space<vmem>>, vector<128x8xf32>
    tpu.vector_store %arg7[%c0_6, %c0_7], %7 {strides = array<i32>} : memref<128x8xf32, #tpu.memory_space<vmem>>, vector<128x8xf32>,
    %c0_i32_8 = arith.constant 0 : i32
    %9 = arith.cmpi eq, %arg1, %c0_i32_8 : i32
    %10 = arith.extui %9 : i1 to i32
    %c0_i32_9 = arith.constant 0 : i32
    %11 = arith.cmpi ne, %10, %c0_i32_9 : i32
    scf.if %11 {
      %c0_10 = arith.constant 0 : index
      %c0_11 = arith.constant 0 : index
      %12 = vector.load %arg7[%c0_10, %c0_11] : memref<128x8xf32, #tpu.memory_space<vmem>>, vector<128x8xf32>
      %c0_12 = arith.constant 0 : index
      %c0_13 = arith.constant 0 : index
      %13 = vector.load %arg4[%c0_12, %c0_13] : memref<8x32xf32, #tpu.memory_space<vmem>>, vector<8x32xf32>
      %cst_14 = arith.constant dense<0.000000e+00> : vector<128x32xf32>
      %14 = tpu.matmul %12, %13, %cst_14 {dimension_numbers = #tpu.dot_dimension_numbers<[1], [0], [0], [1], [0, 0, 1, 1], [], []>} : vector<128x8xf32>, vector<8x32xf32>, vector<128x32xf32> -> vector<128x32xf32>
      %c0_15 = arith.constant 0 : index
      %c0_16 = arith.constant 0 : index
      %15 = vector.load %arg5[%c0_15, %c0_16] : memref<1x32xf32, #tpu.memory_space<vmem>>, vector<1x32xf32>
      %16 = vector.broadcast %15 : vector<1x32xf32> to vector<128x32xf32>
      %17 = arith.addf %14, %16 : vector<128x32xf32>
      %cst_17 = arith.constant 0.000000e+00 : f32
      %18 = vector.broadcast %cst_17 : f32 to vector<128x32xf32>
      %19 = arith.maximumf %17, %18 : vector<128x32xf32>
      %20 = arith.truncf %19 : vector<128x32xf32> to vector<128x32xbf16>
      %c0_18 = arith.constant 0 : index
      %c0_19 = arith.constant 0 : index
      %21 = vector.load %arg6[%c0_18, %c0_19] : memref<128x32xbf16, #tpu.memory_space<vmem>>, vector<128x32xbf16>
      tpu.vector_store %arg6[%c0_18, %c0_19], %20 {strides = array<i32>} : memref<128x32xbf16, #tpu.memory_space<vmem>>, vector<128x32xbf16>,
    } else {
    }
    return
  }
  func.func @transform_0(%arg0: i32, %arg1: i32) -> (i32, i32) {
    %c0_i32 = arith.constant 0 : i32
    return %arg0, %arg1 : i32, i32
  }
  func.func @transform_1(%arg0: i32, %arg1: i32) -> (i32, i32) {
    %c0_i32 = arith.constant 0 : i32
    %c0_i32_0 = arith.constant 0 : i32
    return %arg1, %c0_i32 : i32, i32
  }
  func.func @transform_2(%arg0: i32, %arg1: i32) -> (i32, i32) {
    %c0_i32 = arith.constant 0 : i32
    %c0_i32_0 = arith.constant 0 : i32
    %c0_i32_1 = arith.constant 0 : i32
    return %c0_i32, %c0_i32_0 : i32, i32
  }
  func.func @transform_3(%arg0: i32, %arg1: i32) -> (i32, i32) {
    %c0_i32 = arith.constant 0 : i32
    %c0_i32_0 = arith.constant 0 : i32
    %c0_i32_1 = arith.constant 0 : i32
    return %c0_i32, %c0_i32_0 : i32, i32
  }
  func.func @transform_4(%arg0: i32, %arg1: i32) -> (i32, i32) {
    %c0_i32 = arith.constant 0 : i32
    %c0_i32_0 = arith.constant 0 : i32
    return %arg0, %c0_i32 : i32, i32
  }
}

module attributes {stable_mosaic.version = 11 : i64} {
  func.func @_decoder_kernel(%arg0: i32, %arg1: i32, %arg2: memref<128x16xbf16, #tpu.memory_space<vmem>>, %arg3: memref<128x16xbf16, #tpu.memory_space<vmem>>, %arg4: memref<128x128xf32, #tpu.memory_space<vmem>>) attributes {dimension_semantics = [#tpu.dimension_semantics<parallel>, #tpu.dimension_semantics<parallel>], iteration_bounds = array<i64: 1, 1>, scalar_prefetch = 0 : i64, scratch_operands = 0 : i64, tpu.core_type = #tpu.core_type<tc>, window_params = [{transform_indices = @transform_0, window_bounds = array<i64: 128, 16>}, {transform_indices = @transform_1, window_bounds = array<i64: 128, 16>}, {transform_indices = @transform_2, window_bounds = array<i64: 128, 128>}]} {
    %c0 = arith.constant 0 : index
    %c0_0 = arith.constant 0 : index
    %0 = vector.load %arg2[%c0, %c0_0] : memref<128x16xbf16, #tpu.memory_space<vmem>>, vector<128x16xbf16>
    %c0_1 = arith.constant 0 : index
    %c0_2 = arith.constant 0 : index
    %1 = vector.load %arg3[%c0_1, %c0_2] : memref<128x16xbf16, #tpu.memory_space<vmem>>, vector<128x16xbf16>
    %cst = arith.constant dense<0.000000e+00> : vector<128x128xf32>
    %2 = tpu.matmul %0, %1, %cst {dimension_numbers = #tpu.dot_dimension_numbers<[1], [1], [0], [0], [0, 0, 1, 0], [], []>} : vector<128x16xbf16>, vector<128x16xbf16>, vector<128x128xf32> -> vector<128x128xf32>
    %3 = arith.negf %2 : vector<128x128xf32>
    %4 = math.exp %3 : vector<128x128xf32>
    %cst_3 = arith.constant 1.000000e+00 : f32
    %5 = vector.broadcast %cst_3 : f32 to vector<128x128xf32>
    %6 = arith.addf %5, %4 : vector<128x128xf32>
    %7 = arith.divf %5, %6 : vector<128x128xf32>
    %c0_4 = arith.constant 0 : index
    %c0_5 = arith.constant 0 : index
    %8 = vector.load %arg4[%c0_4, %c0_5] : memref<128x128xf32, #tpu.memory_space<vmem>>, vector<128x128xf32>
    tpu.vector_store %arg4[%c0_4, %c0_5], %7 {strides = array<i32>} : memref<128x128xf32, #tpu.memory_space<vmem>>, vector<128x128xf32>,
    return
  }
  func.func @transform_0(%arg0: i32, %arg1: i32) -> (i32, i32) {
    %c0_i32 = arith.constant 0 : i32
    %c0_i32_0 = arith.constant 0 : i32
    return %arg0, %c0_i32 : i32, i32
  }
  func.func @transform_1(%arg0: i32, %arg1: i32) -> (i32, i32) {
    %c0_i32 = arith.constant 0 : i32
    %c0_i32_0 = arith.constant 0 : i32
    return %arg1, %c0_i32 : i32, i32
  }
  func.func @transform_2(%arg0: i32, %arg1: i32) -> (i32, i32) {
    %c0_i32 = arith.constant 0 : i32
    return %arg0, %arg1 : i32, i32
  }
}

</mosaic_0001>

<llo_original>
// kernel: vgae_forward.5
$region0: #{vgae_forward.5}
  #allocation0 [shape = 'u32[]', space=smem, size = 0x4, offset = 0x4, fixed_abs, tag = 'smem constant byte address 0x4 - core index']
  #allocation1 [shape = 'u32[144,128]{1,0:T(1,128)}', space=vmem, size = 0x12000, scoped, tag = 'internal scratch']
  %s0 = inlined_call_operand.vmem [shape: bf16[128,16], index: 0, kind: input, shape index: {}, may-alias: {0,1}]
  %s1 = inlined_call_operand.vmem [shape: bf16[128,16], index: 1, kind: input, shape index: {}, may-alias: {0,1}]
  %s2 = inlined_call_operand.vmem [shape: f32[128,128], index: 2, kind: output, shape index: {}]
  %s3 = sld [smem:[#allocation0]]
  $region18: #{vgae_forward.5} parent=0
    _
  %s5 = ssub.s32 1, %s3
  %s6 = scalar_select 0, %s5, %s3
  // Predicated region
  $region2: #{vgae_forward.5} parent=0 // pred_check
    _
  $region3: #{vgae_forward.5} parent=0 // pred_check_branch
    %8 = sbr.rel (0) target = $region5
  $region4: #{vgae_forward.5} parent=0 // pred_region
    _
  $region5: #{vgae_forward.5} parent=0 // pred_fallthru
    _
  // Predicated region
  $region6: #{vgae_forward.5} parent=0 // pred_check
    _
  $region7: #{vgae_forward.5} parent=0 // pred_check_branch
    %10 = sbr.rel (0) target = $region9
  $region8: #{vgae_forward.5} parent=0 // pred_region
    _
  $region9: #{vgae_forward.5} parent=0 // pred_fallthru
    _
  %v12 = vld [vmem:[%s0] sm:$0xf]
  %v13 = vld [vmem:[%s0 + $0x4] sm:$0xf]
  %v14 = vld [vmem:[%s0 + $0x8] sm:$0xf]
  %v15 = vld [vmem:[%s0 + $0xc] sm:$0xf]
  %v16 = vld [vmem:[%s0 + $0x10] sm:$0xf]
  %v17 = vld [vmem:[%s0 + $0x14] sm:$0xf]
  %v18 = vld [vmem:[%s0 + $0x18] sm:$0xf]
  %v19 = vld [vmem:[%s0 + $0x1c] sm:$0xf]
  %v20 = vld [vmem:[%s0 + $0x20] sm:$0xf]
  %v21 = vld [vmem:[%s0 + $0x24] sm:$0xf]
  %v22 = vld [vmem:[%s0 + $0x28] sm:$0xf]
  %v23 = vld [vmem:[%s0 + $0x2c] sm:$0xf]
  %v24 = vld [vmem:[%s0 + $0x30] sm:$0xf]
  %v25 = vld [vmem:[%s0 + $0x34] sm:$0xf]
  %v26 = vld [vmem:[%s0 + $0x38] sm:$0xf]
  %v27 = vld [vmem:[%s0 + $0x3c] sm:$0xf]
  %v28 = vld [vmem:[%s1] sm:$0xf]
  %v29 = vld [vmem:[%s1 + $0x4] sm:$0xf]
  %v30 = vld [vmem:[%s1 + $0x8] sm:$0xf]
  %v31 = vld [vmem:[%s1 + $0xc] sm:$0xf]
  %v32 = vld [vmem:[%s1 + $0x10] sm:$0xf]
  %v33 = vld [vmem:[%s1 + $0x14] sm:$0xf]
  %v34 = vld [vmem:[%s1 + $0x18] sm:$0xf]
  %v35 = vld [vmem:[%s1 + $0x1c] sm:$0xf]
  %v36 = vld [vmem:[%s1 + $0x20] sm:$0xf]
  %v37 = vld [vmem:[%s1 + $0x24] sm:$0xf]
  %v38 = vld [vmem:[%s1 + $0x28] sm:$0xf]
  %v39 = vld [vmem:[%s1 + $0x2c] sm:$0xf]
  %v40 = vld [vmem:[%s1 + $0x30] sm:$0xf]
  %v41 = vld [vmem:[%s1 + $0x34] sm:$0xf]
  %v42 = vld [vmem:[%s1 + $0x38] sm:$0xf]
  %v43 = vld [vmem:[%s1 + $0x3c] sm:$0xf]
  %v60 = vunpack.c.l.b16 %v12
  %v61 = vunpack.c.l.b16 %v13
  %v62 = vunpack.c.l.b16 %v14
  %v63 = vunpack.c.l.b16 %v15
  %v64 = vunpack.c.l.b16 %v16
  %v65 = vunpack.c.l.b16 %v17
  %v66 = vunpack.c.l.b16 %v18
  %v67 = vunpack.c.l.b16 %v19
  %v68 = vunpack.c.l.b16 %v20
  %v69 = vunpack.c.l.b16 %v21
  %v70 = vunpack.c.l.b16 %v22
  %v71 = vunpack.c.l.b16 %v23
  %v72 = vunpack.c.l.b16 %v24
  %v73 = vunpack.c.l.b16 %v25
  %v74 = vunpack.c.l.b16 %v26
  %v75 = vunpack.c.l.b16 %v27
  %v76 = vpack.c.b16 %v61, %v60
  %v77 = vpack.c.b16 %v63, %v62
  %v78 = vpack.c.b16 %v65, %v64
  %v79 = vpack.c.b16 %v67, %v66
  %v80 = vpack.c.b16 %v69, %v68
  %v81 = vpack.c.b16 %v71, %v70
  %v82 = vpack.c.b16 %v73, %v72
  %v83 = vpack.c.b16 %v75, %v74
  %v100 = vunpack.c.l.b16 %v28
  %v101 = vunpack.c.l.b16 %v29
  %v102 = vunpack.c.l.b16 %v30
  %v103 = vunpack.c.l.b16 %v31
  %v104 = vunpack.c.l.b16 %v32
  %v105 = vunpack.c.l.b16 %v33
  %v106 = vunpack.c.l.b16 %v34
  %v107 = vunpack.c.l.b16 %v35
  %v108 = vunpack.c.l.b16 %v36
  %v109 = vunpack.c.l.b16 %v37
  %v110 = vunpack.c.l.b16 %v38
  %v111 = vunpack.c.l.b16 %v39
  %v112 = vunpack.c.l.b16 %v40
  %v113 = vunpack.c.l.b16 %v41
  %v114 = vunpack.c.l.b16 %v42
  %v115 = vunpack.c.l.b16 %v43
  %v116 = vpack.c.b16 %v101, %v100
  %v117 = vpack.c.b16 %v103, %v102
  %v118 = vpack.c.b16 %v105, %v104
  %v119 = vpack.c.b16 %v107, %v106
  %v120 = vpack.c.b16 %v109, %v108
  %v121 = vpack.c.b16 %v111, %v110
  %v122 = vpack.c.b16 %v113, %v112
  %v123 = vpack.c.b16 %v115, %v114
  %vm124 = vcmask 130048
  %v126 = vsel %vm124, %v76, 0
  %v129 = vsel %vm124, %v77, 0
  %v132 = vsel %vm124, %v78, 0
  %v135 = vsel %vm124, %v79, 0
  %v138 = vsel %vm124, %v80, 0
  %v141 = vsel %vm124, %v81, 0
  %v144 = vsel %vm124, %v82, 0
  %v147 = vsel %vm124, %v83, 0
  %v150 = vsel %vm124, %v116, 0
  %v153 = vsel %vm124, %v117, 0
  %v156 = vsel %vm124, %v118, 0
  %v159 = vsel %vm124, %v119, 0
  %v162 = vsel %vm124, %v120, 0
  %v165 = vsel %vm124, %v121, 0
  %v168 = vsel %vm124, %v122, 0
  %v171 = vsel %vm124, %v123, 0
  %173 = vmatprep.subr.bf16.mxu0 0
  %174 = vmatpush1.bf16.xpose.msra.mxu0 %v171
  %175 = vmatprep.subr.bf16.mxu0 0
  %176 = vmatpush1.bf16.xpose.msra.mxu0 %v168
  %177 = vmatprep.subr.bf16.mxu0 0
  %178 = vmatpush1.bf16.xpose.msra.mxu0 %v165
  %179 = vmatprep.subr.bf16.mxu0 0
  %180 = vmatpush1.bf16.xpose.msra.mxu0 %v162
  %181 = vmatprep.subr.bf16.mxu0 0
  %182 = vmatpush1.bf16.xpose.msra.mxu0 %v159
  %183 = vmatprep.subr.bf16.mxu0 0
  %184 = vmatpush1.bf16.xpose.msra.mxu0 %v156
  %185 = vmatprep.subr.bf16.mxu0 0
  %186 = vmatpush1.bf16.xpose.msra.mxu0 %v153
  %187 = vmatprep.subr.bf16.mxu0 0
  %188 = vmatpush1.bf16.xpose.msra.mxu0 %v150
  %189 = vmatprep.subr.bf16.mxu0 0
  %190 = vmatpush2.bf16.xpose.msra.mxu0 0
  %191 = vmatprep.subr.bf16.mxu0 0
  %192 = vmatpush2.bf16.xpose.msra.mxu0 0
  %193 = vmatprep.subr.bf16.mxu0 0
  %194 = vmatpush2.bf16.xpose.msra.mxu0 0
  %195 = vmatprep.subr.bf16.mxu0 0
  %196 = vmatpush2.bf16.xpose.msra.mxu0 0
  %197 = vmatprep.subr.bf16.mxu0 0
  %198 = vmatpush2.bf16.xpose.msra.mxu0 0
  %199 = vmatprep.subr.bf16.mxu0 0
  %200 = vmatpush2.bf16.xpose.msra.mxu0 0
  %201 = vmatprep.subr.bf16.mxu0 0
  %202 = vmatpush2.bf16.xpose.msra.mxu0 0
  %203 = vmatprep.subr.bf16.mxu0 0
  %204 = vmatpush2.bf16.xpose.msra.mxu0 0
  %205 = vmatprep.mubr.bf16.mxu0 0
  %206 = vmatmul.mubr.bf16.gmra.mxu0 %v126
  %v207 = vpop.f32.mrf.mxu0
  %v208 = vadd.f32 0.0, %v207
  %v209 = vpop.f32.mrf.mxu0
  %v210 = vpop.f32.mrf.mxu0
  %v211 = vadd.f32 0.0, %v210
  %v212 = vpop.f32.mrf.mxu0
  %213 = vmatprep.mubr.bf16.mxu0 0
  %214 = vmatmul.mubr.bf16.gmra.mxu0 %v129
  %v215 = vpop.f32.mrf.mxu0
  %v216 = vadd.f32 0.0, %v215
  %v217 = vpop.f32.mrf.mxu0
  %v218 = vpop.f32.mrf.mxu0
  %v219 = vadd.f32 0.0, %v218
  %v220 = vpop.f32.mrf.mxu0
  %221 = vmatprep.mubr.bf16.mxu0 0
  %222 = vmatmul.mubr.bf16.gmra.mxu0 %v132
  %v223 = vpop.f32.mrf.mxu0
  %v224 = vadd.f32 0.0, %v223
  %v225 = vpop.f32.mrf.mxu0
  %v226 = vpop.f32.mrf.mxu0
  %v227 = vadd.f32 0.0, %v226
  %v228 = vpop.f32.mrf.mxu0
  %229 = vmatprep.mubr.bf16.mxu0 0
  %230 = vmatmul.mubr.bf16.gmra.mxu0 %v135
  %v231 = vpop.f32.mrf.mxu0
  %v232 = vadd.f32 0.0, %v231
  %v233 = vpop.f32.mrf.mxu0
  %v234 = vpop.f32.mrf.mxu0
  %v235 = vadd.f32 0.0, %v234
  %v236 = vpop.f32.mrf.mxu0
  %237 = vmatprep.mubr.bf16.mxu0 0
  %238 = vmatmul.mubr.bf16.gmra.mxu0 %v138
  %v239 = vpop.f32.mrf.mxu0
  %v240 = vadd.f32 0.0, %v239
  %v241 = vpop.f32.mrf.mxu0
  %v242 = vpop.f32.mrf.mxu0
  %v243 = vadd.f32 0.0, %v242
  %v244 = vpop.f32.mrf.mxu0
  %245 = vmatprep.mubr.bf16.mxu0 0
  %246 = vmatmul.mubr.bf16.gmra.mxu0 %v141
  %v247 = vpop.f32.mrf.mxu0
  %v248 = vadd.f32 0.0, %v247
  %v249 = vpop.f32.mrf.mxu0
  %v250 = vpop.f32.mrf.mxu0
  %v251 = vadd.f32 0.0, %v250
  %v252 = vpop.f32.mrf.mxu0
  %253 = vmatprep.mubr.bf16.mxu0 0
  %254 = vmatmul.mubr.bf16.gmra.mxu0 %v144
  %v255 = vpop.f32.mrf.mxu0
  %v256 = vadd.f32 0.0, %v255
  %v257 = vpop.f32.mrf.mxu0
  %v258 = vpop.f32.mrf.mxu0
  %v259 = vadd.f32 0.0, %v258
  %v260 = vpop.f32.mrf.mxu0
  %261 = vmatprep.mubr.bf16.mxu0 0
  %262 = vmatmul.mubr.bf16.gmra.mxu0 %v147
  %v263 = vpop.f32.mrf.mxu0
  %v264 = vadd.f32 0.0, %v263
  %v265 = vpop.f32.mrf.mxu0
  %v266 = vpop.f32.mrf.mxu0
  %v267 = vadd.f32 0.0, %v266
  %v268 = vpop.f32.mrf.mxu0
  %269 = vdwg.mxu0
  %v270 = vxor.u32 %v208, 2147483648
  %v271 = vxor.u32 %v211, 2147483648
  %v272 = vxor.u32 %v216, 2147483648
  %v273 = vxor.u32 %v219, 2147483648
  %v274 = vxor.u32 %v224, 2147483648
  %v275 = vxor.u32 %v227, 2147483648
  %v276 = vxor.u32 %v232, 2147483648
  %v277 = vxor.u32 %v235, 2147483648
  %v278 = vxor.u32 %v240, 2147483648
  %v279 = vxor.u32 %v243, 2147483648
  %v280 = vxor.u32 %v248, 2147483648
  %v281 = vxor.u32 %v251, 2147483648
  %v282 = vxor.u32 %v256, 2147483648
  %v283 = vxor.u32 %v259, 2147483648
  %v284 = vxor.u32 %v264, 2147483648
  %v285 = vxor.u32 %v267, 2147483648
  %v286 = vmul.f32 %v270, 1.442695
  %v287 = vpow.pop %v286
  %v288 = vmul.f32 %v271, 1.442695
  %v289 = vpow.pop %v288
  %v290 = vmul.f32 %v272, 1.442695
  %v291 = vpow.pop %v290
  %v292 = vmul.f32 %v273, 1.442695
  %v293 = vpow.pop %v292
  %v294 = vmul.f32 %v274, 1.442695
  %v295 = vpow.pop %v294
  %v296 = vmul.f32 %v275, 1.442695
  %v297 = vpow.pop %v296
  %v298 = vmul.f32 %v276, 1.442695
  %v299 = vpow.pop %v298
  %v300 = vmul.f32 %v277, 1.442695
  %v301 = vpow.pop %v300
  %v302 = vmul.f32 %v278, 1.442695
  %v303 = vpow.pop %v302
  %v304 = vmul.f32 %v279, 1.442695
  %v305 = vpow.pop %v304
  %v306 = vmul.f32 %v280, 1.442695
  %v307 = vpow.pop %v306
  %v308 = vmul.f32 %v281, 1.442695
  %v309 = vpow.pop %v308
  %v310 = vmul.f32 %v282, 1.442695
  %v311 = vpow.pop %v310
  %v312 = vmul.f32 %v283, 1.442695
  %v313 = vpow.pop %v312
  %v314 = vmul.f32 %v284, 1.442695
  %v315 = vpow.pop %v314
  %v316 = vmul.f32 %v285, 1.442695
  %v317 = vpow.pop %v316
  %v318 = vadd.f32 %v287, 1.0
  %v319 = vadd.f32 %v289, 1.0
  %v320 = vadd.f32 %v291, 1.0
  %v321 = vadd.f32 %v293, 1.0
  %v322 = vadd.f32 %v295, 1.0
  %v323 = vadd.f32 %v297, 1.0
  %v324 = vadd.f32 %v299, 1.0
  %v325 = vadd.f32 %v301, 1.0
  %v326 = vadd.f32 %v303, 1.0
  %v327 = vadd.f32 %v305, 1.0
  %v328 = vadd.f32 %v307, 1.0
  %v329 = vadd.f32 %v309, 1.0
  %v330 = vadd.f32 %v311, 1.0
  %v331 = vadd.f32 %v313, 1.0
  %v332 = vadd.f32 %v315, 1.0
  %v333 = vadd.f32 %v317, 1.0
  %v334 = vrcp.pop %v318
  %v335 = vmul.f32 1.0, %v334
  %v336 = vrcp.pop %v319
  %v337 = vmul.f32 1.0, %v336
  %v338 = vrcp.pop %v320
  %v339 = vmul.f32 1.0, %v338
  %v340 = vrcp.pop %v321
  %v341 = vmul.f32 1.0, %v340
  %v342 = vrcp.pop %v322
  %v343 = vmul.f32 1.0, %v342
  %v344 = vrcp.pop %v323
  %v345 = vmul.f32 1.0, %v344
  %v346 = vrcp.pop %v324
  %v347 = vmul.f32 1.0, %v346
  %v348 = vrcp.pop %v325
  %v349 = vmul.f32 1.0, %v348
  %v350 = vrcp.pop %v326
  %v351 = vmul.f32 1.0, %v350
  %v352 = vrcp.pop %v327
  %v353 = vmul.f32 1.0, %v352
  %v354 = vrcp.pop %v328
  %v355 = vmul.f32 1.0, %v354
  %v356 = vrcp.pop %v329
  %v357 = vmul.f32 1.0, %v356
  %v358 = vrcp.pop %v330
  %v359 = vmul.f32 1.0, %v358
  %v360 = vrcp.pop %v331
  %v361 = vmul.f32 1.0, %v360
  %v362 = vrcp.pop %v332
  %v363 = vmul.f32 1.0, %v362
  %v364 = vrcp.pop %v333
  %v365 = vmul.f32 1.0, %v364
  %366 = vst [vmem:[%s2] sm:$0xff] %v335
  %367 = vst [vmem:[%s2 + $0x8] sm:$0xff] %v337
  %368 = vst [vmem:[%s2 + $0x10] sm:$0xff] %v339
  %369 = vst [vmem:[%s2 + $0x18] sm:$0xff] %v341
  %370 = vst [vmem:[%s2 + $0x20] sm:$0xff] %v343
  %371 = vst [vmem:[%s2 + $0x28] sm:$0xff] %v345
  %372 = vst [vmem:[%s2 + $0x30] sm:$0xff] %v347
  %373 = vst [vmem:[%s2 + $0x38] sm:$0xff] %v349
  %374 = vst [vmem:[%s2 + $0x40] sm:$0xff] %v351
  %375 = vst [vmem:[%s2 + $0x48] sm:$0xff] %v353
  %376 = vst [vmem:[%s2 + $0x50] sm:$0xff] %v355
  %377 = vst [vmem:[%s2 + $0x58] sm:$0xff] %v357
  %378 = vst [vmem:[%s2 + $0x60] sm:$0xff] %v359
  %379 = vst [vmem:[%s2 + $0x68] sm:$0xff] %v361
  %380 = vst [vmem:[%s2 + $0x70] sm:$0xff] %v363
  %381 = vst [vmem:[%s2 + $0x78] sm:$0xff] %v365
  // Predicated region
  $region10: #{vgae_forward.5} parent=0 // pred_check
    _
  $region11: #{vgae_forward.5} parent=0 // pred_check_branch
    %383 = sbr.rel (0) target = $region13
  $region12: #{vgae_forward.5} parent=0 // pred_region
    _
  $region13: #{vgae_forward.5} parent=0 // pred_fallthru
    _
  // Predicated region
  $region14: #{vgae_forward.5} parent=0 // pred_check
    _
  $region15: #{vgae_forward.5} parent=0 // pred_check_branch
    %385 = sbr.rel (0) target = $region17
  $region16: #{vgae_forward.5} parent=0 // pred_region
    _
  $region17: #{vgae_forward.5} parent=0 // pred_fallthru
    _

// kernel: vgae_forward.4
$region0: #{vgae_forward.4}
  #allocation0 [shape = 'u32[]', space=smem, size = 0x4, offset = 0x4, fixed_abs, tag = 'smem constant byte address 0x4 - core index']
  #allocation1 [shape = 'u32[144,128]{1,0:T(1,128)}', space=vmem, size = 0x12000, scoped, tag = 'internal scratch']
  #allocation2 [shape = 'f32[128,32]{1,0:T(8,128)}', space=vmem, size = 0x10000, scoped, tag = 'scratch operand']
  %s0 = inlined_call_operand.vmem [shape: bf16[128,128], index: 0, kind: input, shape index: {}]
  %s1 = inlined_call_operand.vmem [shape: bf16[128,32], index: 1, kind: input, shape index: {}]
  %s2 = inlined_call_operand.vmem [shape: f32[32,32], index: 2, kind: input, shape index: {}]
  %s3 = inlined_call_operand.vmem [shape: f32[1,32], index: 3, kind: input, shape index: {}]
  %s4 = inlined_call_operand.vmem [shape: f32[128,16], index: 4, kind: input, shape index: {}]
  %s5 = inlined_call_operand.vmem [shape: bf16[128,16], index: 5, kind: output, shape index: {}]
  %s6 = sld [smem:[#allocation0]]
  $region38: #{vgae_forward.4} parent=0
    _
  %s8 = ssub.s32 1, %s6
  %s9 = scalar_select 0, %s8, %s6
  // Predicated region
  $region2: #{vgae_forward.4} parent=0 // pred_check
    _
  $region3: #{vgae_forward.4} parent=0 // pred_check_branch
    %11 = sbr.rel (0) target = $region5
  $region4: #{vgae_forward.4} parent=0 // pred_region
    _
  $region5: #{vgae_forward.4} parent=0 // pred_fallthru
    _
  // Predicated region
  $region6: #{vgae_forward.4} parent=0 // pred_check
    _
  $region7: #{vgae_forward.4} parent=0 // pred_check_branch
    %13 = sbr.rel (0) target = $region9
  $region8: #{vgae_forward.4} parent=0 // pred_region
    _
  $region9: #{vgae_forward.4} parent=0 // pred_fallthru
    _
  // Predicated region
  $region10: #{vgae_forward.4} parent=0 // pred_check
    _
  $region11: #{vgae_forward.4} parent=0 // pred_check_branch
    %15 = sbr.rel (0) target = $region13
  $region12: #{vgae_forward.4} parent=0 // pred_region
    _
  $region13: #{vgae_forward.4} parent=0 // pred_fallthru
    _
  // Predicated region
  $region14: #{vgae_forward.4} parent=0 // pred_check
    _
  $region15: #{vgae_forward.4} parent=0 // pred_check_branch
    %17 = sbr.rel (0) target = $region17
  $region16: #{vgae_forward.4} parent=0 // pred_region
    _
  $region17: #{vgae_forward.4} parent=0 // pred_fallthru
    _
  // Predicated region
  $region18: #{vgae_forward.4} parent=0 // pred_check
    _
  $region19: #{vgae_forward.4} parent=0 // pred_check_branch
    %19 = sbr.rel (0) target = $region21
  $region20: #{vgae_forward.4} parent=0 // pred_region
    _
  $region21: #{vgae_forward.4} parent=0 // pred_fallthru
    _
  %p21 = scmp.eq.s32.totalorder 0, 0
  // Predicated region
  $region22: #{vgae_forward.4} parent=0 // pred_check
    %p22 = pneg %p21
  $region23: #{vgae_forward.4} parent=0 // pred_check_branch
    %24 = sbr.rel (%p22) target = $region25
  $region24: #{vgae_forward.4} parent=0 // pred_region
    %vm25 = vcmask 261120
    %26 = vst.msk [vmem:[#allocation2] sm:$0xff] %vm25, 0.0
    %27 = vst.msk [vmem:[#allocation2 + $0x8] sm:$0xff] %vm25, 0.0
    %28 = vst.msk [vmem:[#allocation2 + $0x10] sm:$0xff] %vm25, 0.0
    %29 = vst.msk [vmem:[#allocation2 + $0x18] sm:$0xff] %vm25, 0.0
    %30 = vst.msk [vmem:[#allocation2 + $0x20] sm:$0xff] %vm25, 0.0
    %31 = vst.msk [vmem:[#allocation2 + $0x28] sm:$0xff] %vm25, 0.0
    %32 = vst.msk [vmem:[#allocation2 + $0x30] sm:$0xff] %vm25, 0.0
    %33 = vst.msk [vmem:[#allocation2 + $0x38] sm:$0xff] %vm25, 0.0
    %34 = vst.msk [vmem:[#allocation2 + $0x40] sm:$0xff] %vm25, 0.0
    %35 = vst.msk [vmem:[#allocation2 + $0x48] sm:$0xff] %vm25, 0.0
    %36 = vst.msk [vmem:[#allocation2 + $0x50] sm:$0xff] %vm25, 0.0
    %37 = vst.msk [vmem:[#allocation2 + $0x58] sm:$0xff] %vm25, 0.0
    %38 = vst.msk [vmem:[#allocation2 + $0x60] sm:$0xff] %vm25, 0.0
    %39 = vst.msk [vmem:[#allocation2 + $0x68] sm:$0xff] %vm25, 0.0
    %40 = vst.msk [vmem:[#allocation2 + $0x70] sm:$0xff] %vm25, 0.0
    %41 = vst.msk [vmem:[#allocation2 + $0x78] sm:$0xff] %vm25, 0.0
  $region25: #{vgae_forward.4} parent=0 // pred_fallthru
    _
  %v42 = vld [vmem:[#allocation2] sm:$0xff]
  %v43 = vld [vmem:[#allocation2 + $0x8] sm:$0xff]
  %v44 = vld [vmem:[#allocation2 + $0x10] sm:$0xff]
  %v45 = vld [vmem:[#allocation2 + $0x18] sm:$0xff]
  %v46 = vld [vmem:[#allocation2 + $0x20] sm:$0xff]
  %v47 = vld [vmem:[#allocation2 + $0x28] sm:$0xff]
  %v48 = vld [vmem:[#allocation2 + $0x30] sm:$0xff]
  %v49 = vld [vmem:[#allocation2 + $0x38] sm:$0xff]
  %v50 = vld [vmem:[#allocation2 + $0x40] sm:$0xff]
  %v51 = vld [vmem:[#allocation2 + $0x48] sm:$0xff]
  %v52 = vld [vmem:[#allocation2 + $0x50] sm:$0xff]
  %v53 = vld [vmem:[#allocation2 + $0x58] sm:$0xff]
  %v54 = vld [vmem:[#allocation2 + $0x60] sm:$0xff]
  %v55 = vld [vmem:[#allocation2 + $0x68] sm:$0xff]
  %v56 = vld [vmem:[#allocation2 + $0x70] sm:$0xff]
  %v57 = vld [vmem:[#allocation2 + $0x78] sm:$0xff]
  %v58 = vld [vmem:[%s0] sm:$0xf]
  %v59 = vld [vmem:[%s0 + $0x4] sm:$0xf]
  %v60 = vld [vmem:[%s0 + $0x8] sm:$0xf]
  %v61 = vld [vmem:[%s0 + $0xc] sm:$0xf]
  %v62 = vld [vmem:[%s0 + $0x10] sm:$0xf]
  %v63 = vld [vmem:[%s0 + $0x14] sm:$0xf]
  %v64 = vld [vmem:[%s0 + $0x18] sm:$0xf]
  %v65 = vld [vmem:[%s0 + $0x1c] sm:$0xf]
  %v66 = vld [vmem:[%s0 + $0x20] sm:$0xf]
  %v67 = vld [vmem:[%s0 + $0x24] sm:$0xf]
  %v68 = vld [vmem:[%s0 + $0x28] sm:$0xf]
  %v69 = vld [vmem:[%s0 + $0x2c] sm:$0xf]
  %v70 = vld [vmem:[%s0 + $0x30] sm:$0xf]
  %v71 = vld [vmem:[%s0 + $0x34] sm:$0xf]
  %v72 = vld [vmem:[%s0 + $0x38] sm:$0xf]
  %v73 = vld [vmem:[%s0 + $0x3c] sm:$0xf]
  %v74 = vld [vmem:[%s1] sm:$0xf]
  %v75 = vld [vmem:[%s1 + $0x4] sm:$0xf]
  %v76 = vld [vmem:[%s1 + $0x8] sm:$0xf]
  %v77 = vld [vmem:[%s1 + $0xc] sm:$0xf]
  %v78 = vld [vmem:[%s1 + $0x10] sm:$0xf]
  %v79 = vld [vmem:[%s1 + $0x14] sm:$0xf]
  %v80 = vld [vmem:[%s1 + $0x18] sm:$0xf]
  %v81 = vld [vmem:[%s1 + $0x1c] sm:$0xf]
  %v82 = vld [vmem:[%s1 + $0x20] sm:$0xf]
  %v83 = vld [vmem:[%s1 + $0x24] sm:$0xf]
  %v84 = vld [vmem:[%s1 + $0x28] sm:$0xf]
  %v85 = vld [vmem:[%s1 + $0x2c] sm:$0xf]
  %v86 = vld [vmem:[%s1 + $0x30] sm:$0xf]
  %v87 = vld [vmem:[%s1 + $0x34] sm:$0xf]
  %v88 = vld [vmem:[%s1 + $0x38] sm:$0xf]
  %v89 = vld [vmem:[%s1 + $0x3c] sm:$0xf]
  %v106 = vunpack.c.l.b16 %v58
  %v107 = vunpack.c.l.b16 %v59
  %v108 = vunpack.c.l.b16 %v60
  %v109 = vunpack.c.l.b16 %v61
  %v110 = vunpack.c.l.b16 %v62
  %v111 = vunpack.c.l.b16 %v63
  %v112 = vunpack.c.l.b16 %v64
  %v113 = vunpack.c.l.b16 %v65
  %v114 = vunpack.c.l.b16 %v66
  %v115 = vunpack.c.l.b16 %v67
  %v116 = vunpack.c.l.b16 %v68
  %v117 = vunpack.c.l.b16 %v69
  %v118 = vunpack.c.l.b16 %v70
  %v119 = vunpack.c.l.b16 %v71
  %v120 = vunpack.c.l.b16 %v72
  %v121 = vunpack.c.l.b16 %v73
  %v122 = vpack.c.b16 %v107, %v106
  %v123 = vpack.c.b16 %v109, %v108
  %v124 = vpack.c.b16 %v111, %v110
  %v125 = vpack.c.b16 %v113, %v112
  %v126 = vpack.c.b16 %v115, %v114
  %v127 = vpack.c.b16 %v117, %v116
  %v128 = vpack.c.b16 %v119, %v118
  %v129 = vpack.c.b16 %v121, %v120
  %v154 = vunpack.c.l.b16 %v74
  %v155 = vunpack.c.l.b16 %v75
  %v156 = vunpack.c.l.b16 %v76
  %v157 = vunpack.c.l.b16 %v77
  %v158 = vunpack.c.l.b16 %v78
  %v159 = vunpack.c.l.b16 %v79
  %v160 = vunpack.c.l.b16 %v80
  %v161 = vunpack.c.l.b16 %v81
  %v162 = vunpack.c.l.b16 %v82
  %v163 = vunpack.c.l.b16 %v83
  %v164 = vunpack.c.l.b16 %v84
  %v165 = vunpack.c.l.b16 %v85
  %v166 = vunpack.c.l.b16 %v86
  %v167 = vunpack.c.l.b16 %v87
  %v168 = vunpack.c.l.b16 %v88
  %v169 = vunpack.c.l.b16 %v89
  %v170 = vpack.c.b16 %v155, %v154
  %v171 = vpack.c.b16 %v157, %v156
  %v172 = vpack.c.b16 %v159, %v158
  %v173 = vpack.c.b16 %v161, %v160
  %v174 = vpack.c.b16 %v163, %v162
  %v175 = vpack.c.b16 %v165, %v164
  %v176 = vpack.c.b16 %v167, %v166
  %v177 = vpack.c.b16 %v169, %v168
  %186 = vmatprep.subr.bf16.mxu0 0
  %187 = vmatpush1.bf16.msra.mxu0 %v177
  %188 = vmatprep.subr.bf16.mxu0 0
  %189 = vmatpush1.bf16.msra.mxu0 %v176
  %190 = vmatprep.subr.bf16.mxu0 0
  %191 = vmatpush1.bf16.msra.mxu0 %v175
  %192 = vmatprep.subr.bf16.mxu0 0
  %193 = vmatpush1.bf16.msra.mxu0 %v174
  %194 = vmatprep.subr.bf16.mxu0 0
  %195 = vmatpush1.bf16.msra.mxu0 %v173
  %196 = vmatprep.subr.bf16.mxu0 0
  %197 = vmatpush1.bf16.msra.mxu0 %v172
  %198 = vmatprep.subr.bf16.mxu0 0
  %199 = vmatpush1.bf16.msra.mxu0 %v171
  %200 = vmatprep.subr.bf16.mxu0 0
  %201 = vmatpush1.bf16.msra.mxu0 %v170
  %202 = vmatprep.subr.bf16.mxu0 0
  %203 = vmatpush2.bf16.msra.mxu0 0
  %204 = vmatprep.subr.bf16.mxu0 0
  %205 = vmatpush2.bf16.msra.mxu0 0
  %206 = vmatprep.subr.bf16.mxu0 0
  %207 = vmatpush2.bf16.msra.mxu0 0
  %208 = vmatprep.subr.bf16.mxu0 0
  %209 = vmatpush2.bf16.msra.mxu0 0
  %210 = vmatprep.subr.bf16.mxu0 0
  %211 = vmatpush2.bf16.msra.mxu0 0
  %212 = vmatprep.subr.bf16.mxu0 0
  %213 = vmatpush2.bf16.msra.mxu0 0
  %214 = vmatprep.subr.bf16.mxu0 0
  %215 = vmatpush2.bf16.msra.mxu0 0
  %216 = vmatprep.subr.bf16.mxu0 0
  %217 = vmatpush2.bf16.msra.mxu0 0
  %218 = vmatprep.mubr.bf16.mxu0 0
  %219 = vmatmul.mubr.bf16.gmra.mxu0 %v122
  %v220 = vpop.f32.mrf.mxu0
  %v221 = vadd.f32 0.0, %v220
  %v222 = vpop.f32.mrf.mxu0
  %v223 = vpop.f32.mrf.mxu0
  %v224 = vadd.f32 0.0, %v223
  %v225 = vpop.f32.mrf.mxu0
  %226 = vmatprep.mubr.bf16.mxu0 0
  %227 = vmatmul.mubr.bf16.gmra.mxu0 %v123
  %v228 = vpop.f32.mrf.mxu0
  %v229 = vadd.f32 0.0, %v228
  %v230 = vpop.f32.mrf.mxu0
  %v231 = vpop.f32.mrf.mxu0
  %v232 = vadd.f32 0.0, %v231
  %v233 = vpop.f32.mrf.mxu0
  %234 = vmatprep.mubr.bf16.mxu0 0
  %235 = vmatmul.mubr.bf16.gmra.mxu0 %v124
  %v236 = vpop.f32.mrf.mxu0
  %v237 = vadd.f32 0.0, %v236
  %v238 = vpop.f32.mrf.mxu0
  %v239 = vpop.f32.mrf.mxu0
  %v240 = vadd.f32 0.0, %v239
  %v241 = vpop.f32.mrf.mxu0
  %242 = vmatprep.mubr.bf16.mxu0 0
  %243 = vmatmul.mubr.bf16.gmra.mxu0 %v125
  %v244 = vpop.f32.mrf.mxu0
  %v245 = vadd.f32 0.0, %v244
  %v246 = vpop.f32.mrf.mxu0
  %v247 = vpop.f32.mrf.mxu0
  %v248 = vadd.f32 0.0, %v247
  %v249 = vpop.f32.mrf.mxu0
  %250 = vmatprep.mubr.bf16.mxu0 0
  %251 = vmatmul.mubr.bf16.gmra.mxu0 %v126
  %v252 = vpop.f32.mrf.mxu0
  %v253 = vadd.f32 0.0, %v252
  %v254 = vpop.f32.mrf.mxu0
  %v255 = vpop.f32.mrf.mxu0
  %v256 = vadd.f32 0.0, %v255
  %v257 = vpop.f32.mrf.mxu0
  %258 = vmatprep.mubr.bf16.mxu0 0
  %259 = vmatmul.mubr.bf16.gmra.mxu0 %v127
  %v260 = vpop.f32.mrf.mxu0
  %v261 = vadd.f32 0.0, %v260
  %v262 = vpop.f32.mrf.mxu0
  %v263 = vpop.f32.mrf.mxu0
  %v264 = vadd.f32 0.0, %v263
  %v265 = vpop.f32.mrf.mxu0
  %266 = vmatprep.mubr.bf16.mxu0 0
  %267 = vmatmul.mubr.bf16.gmra.mxu0 %v128
  %v268 = vpop.f32.mrf.mxu0
  %v269 = vadd.f32 0.0, %v268
  %v270 = vpop.f32.mrf.mxu0
  %v271 = vpop.f32.mrf.mxu0
  %v272 = vadd.f32 0.0, %v271
  %v273 = vpop.f32.mrf.mxu0
  %274 = vmatprep.mubr.bf16.mxu0 0
  %275 = vmatmul.mubr.bf16.gmra.mxu0 %v129
  %v276 = vpop.f32.mrf.mxu0
  %v277 = vadd.f32 0.0, %v276
  %v278 = vpop.f32.mrf.mxu0
  %v279 = vpop.f32.mrf.mxu0
  %v280 = vadd.f32 0.0, %v279
  %v281 = vpop.f32.mrf.mxu0
  %282 = vdwg.mxu0
  %v283 = vadd.f32 %v42, %v221
  %v284 = vadd.f32 %v43, %v224
  %v285 = vadd.f32 %v44, %v229
  %v286 = vadd.f32 %v45, %v232
  %v287 = vadd.f32 %v46, %v237
  %v288 = vadd.f32 %v47, %v240
  %v289 = vadd.f32 %v48, %v245
  %v290 = vadd.f32 %v49, %v248
  %v291 = vadd.f32 %v50, %v253
  %v292 = vadd.f32 %v51, %v256
  %v293 = vadd.f32 %v52, %v261
  %v294 = vadd.f32 %v53, %v264
  %v295 = vadd.f32 %v54, %v269
  %v296 = vadd.f32 %v55, %v272
  %v297 = vadd.f32 %v56, %v277
  %v298 = vadd.f32 %v57, %v280
  %vm299 = vcmask 261120
  %300 = vst.msk [vmem:[#allocation2] sm:$0xff] %vm299, %v283
  %301 = vst.msk [vmem:[#allocation2 + $0x8] sm:$0xff] %vm299, %v284
  %302 = vst.msk [vmem:[#allocation2 + $0x10] sm:$0xff] %vm299, %v285
  %303 = vst.msk [vmem:[#allocation2 + $0x18] sm:$0xff] %vm299, %v286
  %304 = vst.msk [vmem:[#allocation2 + $0x20] sm:$0xff] %vm299, %v287
  %305 = vst.msk [vmem:[#allocation2 + $0x28] sm:$0xff] %vm299, %v288
  %306 = vst.msk [vmem:[#allocation2 + $0x30] sm:$0xff] %vm299, %v289
  %307 = vst.msk [vmem:[#allocation2 + $0x38] sm:$0xff] %vm299, %v290
  %308 = vst.msk [vmem:[#allocation2 + $0x40] sm:$0xff] %vm299, %v291
  %309 = vst.msk [vmem:[#allocation2 + $0x48] sm:$0xff] %vm299, %v292
  %310 = vst.msk [vmem:[#allocation2 + $0x50] sm:$0xff] %vm299, %v293
  %311 = vst.msk [vmem:[#allocation2 + $0x58] sm:$0xff] %vm299, %v294
  %312 = vst.msk [vmem:[#allocation2 + $0x60] sm:$0xff] %vm299, %v295
  %313 = vst.msk [vmem:[#allocation2 + $0x68] sm:$0xff] %vm299, %v296
  %314 = vst.msk [vmem:[#allocation2 + $0x70] sm:$0xff] %vm299, %v297
  %315 = vst.msk [vmem:[#allocation2 + $0x78] sm:$0xff] %vm299, %v298
  // Predicated region
  $region26: #{vgae_forward.4} parent=0 // pred_check
    %p316 = pneg %p21
  $region27: #{vgae_forward.4} parent=0 // pred_check_branch
    %318 = sbr.rel (%p316) target = $region29
  $region28: #{vgae_forward.4} parent=0 // pred_region
    %v319 = vld [vmem:[#allocation2] sm:$0xff]
    %v320 = vld [vmem:[#allocation2 + $0x8] sm:$0xff]
    %v321 = vld [vmem:[#allocation2 + $0x10] sm:$0xff]
    %v322 = vld [vmem:[#allocation2 + $0x18] sm:$0xff]
    %v323 = vld [vmem:[#allocation2 + $0x20] sm:$0xff]
    %v324 = vld [vmem:[#allocation2 + $0x28] sm:$0xff]
    %v325 = vld [vmem:[#allocation2 + $0x30] sm:$0xff]
    %v326 = vld [vmem:[#allocation2 + $0x38] sm:$0xff]
    %v327 = vld [vmem:[#allocation2 + $0x40] sm:$0xff]
    %v328 = vld [vmem:[#allocation2 + $0x48] sm:$0xff]
    %v329 = vld [vmem:[#allocation2 + $0x50] sm:$0xff]
    %v330 = vld [vmem:[#allocation2 + $0x58] sm:$0xff]
    %v331 = vld [vmem:[#allocation2 + $0x60] sm:$0xff]
    %v332 = vld [vmem:[#allocation2 + $0x68] sm:$0xff]
    %v333 = vld [vmem:[#allocation2 + $0x70] sm:$0xff]
    %v334 = vld [vmem:[#allocation2 + $0x78] sm:$0xff]
    %v335 = vld [vmem:[%s2] sm:$0xff]
    %v336 = vld [vmem:[%s2 + $0x8] sm:$0xff]
    %v337 = vld [vmem:[%s2 + $0x10] sm:$0xff]
    %v338 = vld [vmem:[%s2 + $0x18] sm:$0xff]
    %v339 = vld [vmem:[%s3] sm:$0x1]
    %v341 = vlaneseq
    %v342 = vshrl.u32 %v341, 7
    %v343 = vsub.s32 0, %v342
    %v344 = vrot.slane %v339, %v343
    %v347 = vsel %vm299, %v319, 0
    %v350 = vsel %vm299, %v320, 0
    %v353 = vsel %vm299, %v321, 0
    %v356 = vsel %vm299, %v322, 0
    %v359 = vsel %vm299, %v323, 0
    %v362 = vsel %vm299, %v324, 0
    %v365 = vsel %vm299, %v325, 0
    %v368 = vsel %vm299, %v326, 0
    %v371 = vsel %vm299, %v327, 0
    %v374 = vsel %vm299, %v328, 0
    %v377 = vsel %vm299, %v329, 0
    %v380 = vsel %vm299, %v330, 0
    %v383 = vsel %vm299, %v331, 0
    %v386 = vsel %vm299, %v332, 0
    %v389 = vsel %vm299, %v333, 0
    %v392 = vsel %vm299, %v334, 0
    %394 = vmatprep.subr.mxu0 0.0
    %395 = vmatpush1.msra.mxu0 0.0
    %396 = vmatprep.subr.mxu0 0.0
    %397 = vmatpush1.msra.mxu0 0.0
    %398 = vmatprep.subr.mxu0 0.0
    %399 = vmatpush1.msra.mxu0 0.0
    %400 = vmatprep.subr.mxu0 0.0
    %401 = vmatpush1.msra.mxu0 0.0
    %402 = vmatprep.subr.mxu0 0.0
    %403 = vmatpush1.msra.mxu0 0.0
    %404 = vmatprep.subr.mxu0 0.0
    %405 = vmatpush1.msra.mxu0 0.0
    %406 = vmatprep.subr.mxu0 0.0
    %407 = vmatpush1.msra.mxu0 0.0
    %408 = vmatprep.subr.mxu0 0.0
    %409 = vmatpush1.msra.mxu0 0.0
    %410 = vmatprep.subr.mxu0 0.0
    %411 = vmatpush1.msra.mxu0 0.0
    %412 = vmatprep.subr.mxu0 0.0
    %413 = vmatpush1.msra.mxu0 0.0
    %414 = vmatprep.subr.mxu0 0.0
    %415 = vmatpush1.msra.mxu0 0.0
    %416 = vmatprep.subr.mxu0 0.0
    %417 = vmatpush1.msra.mxu0 0.0
    %418 = vmatprep.subr.mxu0 0.0
    %419 = vmatpush1.msra.mxu0 %v338
    %420 = vmatprep.subr.mxu0 0.0
    %421 = vmatpush1.msra.mxu0 %v337
    %422 = vmatprep.subr.mxu0 0.0
    %423 = vmatpush1.msra.mxu0 %v336
    %424 = vmatprep.subr.mxu0 0.0
    %425 = vmatpush1.msra.mxu0 %v335
    %426 = vmatprep.subr.mxu0 0.0
    %427 = vmatpush2.msra.mxu0 0.0
    %428 = vmatprep.subr.mxu0 0.0
    %429 = vmatpush2.msra.mxu0 0.0
    %430 = vmatprep.subr.mxu0 0.0
    %431 = vmatpush2.msra.mxu0 0.0
    %432 = vmatprep.subr.mxu0 0.0
    %433 = vmatpush2.msra.mxu0 0.0
    %434 = vmatprep.subr.mxu0 0.0
    %435 = vmatpush2.msra.mxu0 0.0
    %436 = vmatprep.subr.mxu0 0.0
    %437 = vmatpush2.msra.mxu0 0.0
    %438 = vmatprep.subr.mxu0 0.0
    %439 = vmatpush2.msra.mxu0 0.0
    %440 = vmatprep.subr.mxu0 0.0
    %441 = vmatpush2.msra.mxu0 0.0
    %442 = vmatprep.subr.mxu0 0.0
    %443 = vmatpush2.msra.mxu0 0.0
    %444 = vmatprep.subr.mxu0 0.0
    %445 = vmatpush2.msra.mxu0 0.0
    %446 = vmatprep.subr.mxu0 0.0
    %447 = vmatpush2.msra.mxu0 0.0
    %448 = vmatprep.subr.mxu0 0.0
    %449 = vmatpush2.msra.mxu0 0.0
    %450 = vmatprep.subr.mxu0 0.0
    %451 = vmatpush2.msra.mxu0 0.0
    %452 = vmatprep.subr.mxu0 0.0
    %453 = vmatpush2.msra.mxu0 0.0
    %454 = vmatprep.subr.mxu0 0.0
    %455 = vmatpush2.msra.mxu0 0.0
    %456 = vmatprep.subr.mxu0 0.0
    %457 = vmatpush2.msra.mxu0 0.0
    %458 = vmatprep.mubr.f32.mxu0 0.0
    %459 = vmatmul.mubr.f32.gmra.mxu0 %v347
    %v460 = vpop.f32.mrf.mxu0
    %v461 = vadd.f32 %v344, %v460
    %v462 = vpop.f32.mrf.mxu0
    %463 = vmatprep.mubr.f32.mxu0 0.0
    %464 = vmatmul.mubr.f32.gmra.mxu0 %v350
    %v465 = vpop.f32.mrf.mxu0
    %v466 = vadd.f32 %v344, %v465
    %v467 = vpop.f32.mrf.mxu0
    %468 = vmatprep.mubr.f32.mxu0 0.0
    %469 = vmatmul.mubr.f32.gmra.mxu0 %v353
    %v470 = vpop.f32.mrf.mxu0
    %v471 = vadd.f32 %v344, %v470
    %v472 = vpop.f32.mrf.mxu0
    %473 = vmatprep.mubr.f32.mxu0 0.0
    %474 = vmatmul.mubr.f32.gmra.mxu0 %v356
    %v475 = vpop.f32.mrf.mxu0
    %v476 = vadd.f32 %v344, %v475
    %v477 = vpop.f32.mrf.mxu0
    %478 = vmatprep.mubr.f32.mxu0 0.0
    %479 = vmatmul.mubr.f32.gmra.mxu0 %v359
    %v480 = vpop.f32.mrf.mxu0
    %v481 = vadd.f32 %v344, %v480
    %v482 = vpop.f32.mrf.mxu0
    %483 = vmatprep.mubr.f32.mxu0 0.0
    %484 = vmatmul.mubr.f32.gmra.mxu0 %v362
    %v485 = vpop.f32.mrf.mxu0
    %v486 = vadd.f32 %v344, %v485
    %v487 = vpop.f32.mrf.mxu0
    %488 = vmatprep.mubr.f32.mxu0 0.0
    %489 = vmatmul.mubr.f32.gmra.mxu0 %v365
    %v490 = vpop.f32.mrf.mxu0
    %v491 = vadd.f32 %v344, %v490
    %v492 = vpop.f32.mrf.mxu0
    %493 = vmatprep.mubr.f32.mxu0 0.0
    %494 = vmatmul.mubr.f32.gmra.mxu0 %v368
    %v495 = vpop.f32.mrf.mxu0
    %v496 = vadd.f32 %v344, %v495
    %v497 = vpop.f32.mrf.mxu0
    %498 = vmatprep.mubr.f32.mxu0 0.0
    %499 = vmatmul.mubr.f32.gmra.mxu0 %v371
    %v500 = vpop.f32.mrf.mxu0
    %v501 = vadd.f32 %v344, %v500
    %v502 = vpop.f32.mrf.mxu0
    %503 = vmatprep.mubr.f32.mxu0 0.0
    %504 = vmatmul.mubr.f32.gmra.mxu0 %v374
    %v505 = vpop.f32.mrf.mxu0
    %v506 = vadd.f32 %v344, %v505
    %v507 = vpop.f32.mrf.mxu0
    %508 = vmatprep.mubr.f32.mxu0 0.0
    %509 = vmatmul.mubr.f32.gmra.mxu0 %v377
    %v510 = vpop.f32.mrf.mxu0
    %v511 = vadd.f32 %v344, %v510
    %v512 = vpop.f32.mrf.mxu0
    %513 = vmatprep.mubr.f32.mxu0 0.0
    %514 = vmatmul.mubr.f32.gmra.mxu0 %v380
    %v515 = vpop.f32.mrf.mxu0
    %v516 = vadd.f32 %v344, %v515
    %v517 = vpop.f32.mrf.mxu0
    %518 = vmatprep.mubr.f32.mxu0 0.0
    %519 = vmatmul.mubr.f32.gmra.mxu0 %v383
    %v520 = vpop.f32.mrf.mxu0
    %v521 = vadd.f32 %v344, %v520
    %v522 = vpop.f32.mrf.mxu0
    %523 = vmatprep.mubr.f32.mxu0 0.0
    %524 = vmatmul.mubr.f32.gmra.mxu0 %v386
    %v525 = vpop.f32.mrf.mxu0
    %v526 = vadd.f32 %v344, %v525
    %v527 = vpop.f32.mrf.mxu0
    %528 = vmatprep.mubr.f32.mxu0 0.0
    %529 = vmatmul.mubr.f32.gmra.mxu0 %v389
    %v530 = vpop.f32.mrf.mxu0
    %v531 = vadd.f32 %v344, %v530
    %v532 = vpop.f32.mrf.mxu0
    %533 = vmatprep.mubr.f32.mxu0 0.0
    %534 = vmatmul.mubr.f32.gmra.mxu0 %v392
    %v535 = vpop.f32.mrf.mxu0
    %v536 = vadd.f32 %v344, %v535
    %v537 = vpop.f32.mrf.mxu0
    %538 = vdwg.mxu0
    %v539 = vmul.f32 %v461, 1.442695
    %v540 = vpow.pop %v539
    %v541 = vmul.f32 %v466, 1.442695
    %v542 = vpow.pop %v541
    %v543 = vmul.f32 %v471, 1.442695
    %v544 = vpow.pop %v543
    %v545 = vmul.f32 %v476, 1.442695
    %v546 = vpow.pop %v545
    %v547 = vmul.f32 %v481, 1.442695
    %v548 = vpow.pop %v547
    %v549 = vmul.f32 %v486, 1.442695
    %v550 = vpow.pop %v549
    %v551 = vmul.f32 %v491, 1.442695
    %v552 = vpow.pop %v551
    %v553 = vmul.f32 %v496, 1.442695
    %v554 = vpow.pop %v553
    %v555 = vmul.f32 %v501, 1.442695
    %v556 = vpow.pop %v555
    %v557 = vmul.f32 %v506, 1.442695
    %v558 = vpow.pop %v557
    %v559 = vmul.f32 %v511, 1.442695
    %v560 = vpow.pop %v559
    %v561 = vmul.f32 %v516, 1.442695
    %v562 = vpow.pop %v561
    %v563 = vmul.f32 %v521, 1.442695
    %v564 = vpow.pop %v563
    %v565 = vmul.f32 %v526, 1.442695
    %v566 = vpow.pop %v565
    %v567 = vmul.f32 %v531, 1.442695
    %v568 = vpow.pop %v567
    %v569 = vmul.f32 %v536, 1.442695
    %v570 = vpow.pop %v569
    %v571 = vld [vmem:[%s4] sm:$0xff]
    %v572 = vld [vmem:[%s4 + $0x8] sm:$0xff]
    %v573 = vld [vmem:[%s4 + $0x10] sm:$0xff]
    %v574 = vld [vmem:[%s4 + $0x18] sm:$0xff]
    %v575 = vld [vmem:[%s4 + $0x20] sm:$0xff]
    %v576 = vld [vmem:[%s4 + $0x28] sm:$0xff]
    %v577 = vld [vmem:[%s4 + $0x30] sm:$0xff]
    %v578 = vld [vmem:[%s4 + $0x38] sm:$0xff]
    %v579 = vld [vmem:[%s4 + $0x40] sm:$0xff]
    %v580 = vld [vmem:[%s4 + $0x48] sm:$0xff]
    %v581 = vld [vmem:[%s4 + $0x50] sm:$0xff]
    %v582 = vld [vmem:[%s4 + $0x58] sm:$0xff]
    %v583 = vld [vmem:[%s4 + $0x60] sm:$0xff]
    %v584 = vld [vmem:[%s4 + $0x68] sm:$0xff]
    %v585 = vld [vmem:[%s4 + $0x70] sm:$0xff]
    %v586 = vld [vmem:[%s4 + $0x78] sm:$0xff]
    %603 = vrot.lane.b32.xlu0 %v540, 112
    %v604 = vpop.permute.xlu0 %603
    %605 = vrot.lane.b32.xlu0 %v542, 112
    %v606 = vpop.permute.xlu0 %605
    %607 = vrot.lane.b32.xlu0 %v544, 112
    %v608 = vpop.permute.xlu0 %607
    %609 = vrot.lane.b32.xlu0 %v546, 112
    %v610 = vpop.permute.xlu0 %609
    %611 = vrot.lane.b32.xlu0 %v548, 112
    %v612 = vpop.permute.xlu0 %611
    %613 = vrot.lane.b32.xlu0 %v550, 112
    %v614 = vpop.permute.xlu0 %613
    %615 = vrot.lane.b32.xlu0 %v552, 112
    %v616 = vpop.permute.xlu0 %615
    %617 = vrot.lane.b32.xlu0 %v554, 112
    %v618 = vpop.permute.xlu0 %617
    %619 = vrot.lane.b32.xlu0 %v556, 112
    %v620 = vpop.permute.xlu0 %619
    %621 = vrot.lane.b32.xlu0 %v558, 112
    %v622 = vpop.permute.xlu0 %621
    %623 = vrot.lane.b32.xlu0 %v560, 112
    %v624 = vpop.permute.xlu0 %623
    %625 = vrot.lane.b32.xlu0 %v562, 112
    %v626 = vpop.permute.xlu0 %625
    %627 = vrot.lane.b32.xlu0 %v564, 112
    %v628 = vpop.permute.xlu0 %627
    %629 = vrot.lane.b32.xlu0 %v566, 112
    %v630 = vpop.permute.xlu0 %629
    %631 = vrot.lane.b32.xlu0 %v568, 112
    %v632 = vpop.permute.xlu0 %631
    %633 = vrot.lane.b32.xlu0 %v570, 112
    %v634 = vpop.permute.xlu0 %633
    %v651 = vmul.f32 %v571, %v604
    %v652 = vmul.f32 %v572, %v606
    %v653 = vmul.f32 %v573, %v608
    %v654 = vmul.f32 %v574, %v610
    %v655 = vmul.f32 %v575, %v612
    %v656 = vmul.f32 %v576, %v614
    %v657 = vmul.f32 %v577, %v616
    %v658 = vmul.f32 %v578, %v618
    %v659 = vmul.f32 %v579, %v620
    %v660 = vmul.f32 %v580, %v622
    %v661 = vmul.f32 %v581, %v624
    %v662 = vmul.f32 %v582, %v626
    %v663 = vmul.f32 %v583, %v628
    %v664 = vmul.f32 %v584, %v630
    %v665 = vmul.f32 %v585, %v632
    %v666 = vmul.f32 %v586, %v634
    %v667 = vadd.f32 %v461, %v651
    %v668 = vadd.f32 %v466, %v652
    %v669 = vadd.f32 %v471, %v653
    %v670 = vadd.f32 %v476, %v654
    %v671 = vadd.f32 %v481, %v655
    %v672 = vadd.f32 %v486, %v656
    %v673 = vadd.f32 %v491, %v657
    %v674 = vadd.f32 %v496, %v658
    %v675 = vadd.f32 %v501, %v659
    %v676 = vadd.f32 %v506, %v660
    %v677 = vadd.f32 %v511, %v661
    %v678 = vadd.f32 %v516, %v662
    %v679 = vadd.f32 %v521, %v663
    %v680 = vadd.f32 %v526, %v664
    %v681 = vadd.f32 %v531, %v665
    %v682 = vadd.f32 %v536, %v666
    %v683 = vpack.c.bf16 %v668, %v667
    %v684 = vpack.c.bf16 %v670, %v669
    %v685 = vpack.c.bf16 %v672, %v671
    %v686 = vpack.c.bf16 %v674, %v673
    %v687 = vpack.c.bf16 %v676, %v675
    %v688 = vpack.c.bf16 %v678, %v677
    %v689 = vpack.c.bf16 %v680, %v679
    %v690 = vpack.c.bf16 %v682, %v681
    %v699 = vunpack.c.l.b16 %v683
    %v700 = vunpack.c.h.b16 %v683
    %v701 = vunpack.c.l.b16 %v684
    %v702 = vunpack.c.h.b16 %v684
    %v703 = vunpack.c.l.b16 %v685
    %v704 = vunpack.c.h.b16 %v685
    %v705 = vunpack.c.l.b16 %v686
    %v706 = vunpack.c.h.b16 %v686
    %v707 = vunpack.c.l.b16 %v687
    %v708 = vunpack.c.h.b16 %v687
    %v709 = vunpack.c.l.b16 %v688
    %v710 = vunpack.c.h.b16 %v688
    %v711 = vunpack.c.l.b16 %v689
    %v712 = vunpack.c.h.b16 %v689
    %v713 = vunpack.c.l.b16 %v690
    %v714 = vunpack.c.h.b16 %v690
    %v715 = vpack.c.b16 %v699, %v699
    %v716 = vpack.c.b16 %v700, %v700
    %v717 = vpack.c.b16 %v701, %v701
    %v718 = vpack.c.b16 %v702, %v702
    %v719 = vpack.c.b16 %v703, %v703
    %v720 = vpack.c.b16 %v704, %v704
    %v721 = vpack.c.b16 %v705, %v705
    %v722 = vpack.c.b16 %v706, %v706
    %v723 = vpack.c.b16 %v707, %v707
    %v724 = vpack.c.b16 %v708, %v708
    %v725 = vpack.c.b16 %v709, %v709
    %v726 = vpack.c.b16 %v710, %v710
    %v727 = vpack.c.b16 %v711, %v711
    %v728 = vpack.c.b16 %v712, %v712
    %v729 = vpack.c.b16 %v713, %v713
    %v730 = vpack.c.b16 %v714, %v714
    %vm747 = vcmask 125952
    %748 = vst.msk [vmem:[%s5] sm:$0xf] %vm747, %v715
    %749 = vst.msk [vmem:[%s5 + $0x4] sm:$0xf] %vm747, %v716
    %750 = vst.msk [vmem:[%s5 + $0x8] sm:$0xf] %vm747, %v717
    %751 = vst.msk [vmem:[%s5 + $0xc] sm:$0xf] %vm747, %v718
    %752 = vst.msk [vmem:[%s5 + $0x10] sm:$0xf] %vm747, %v719
    %753 = vst.msk [vmem:[%s5 + $0x14] sm:$0xf] %vm747, %v720
    %754 = vst.msk [vmem:[%s5 + $0x18] sm:$0xf] %vm747, %v721
    %755 = vst.msk [vmem:[%s5 + $0x1c] sm:$0xf] %vm747, %v722
    %756 = vst.msk [vmem:[%s5 + $0x20] sm:$0xf] %vm747, %v723
    %757 = vst.msk [vmem:[%s5 + $0x24] sm:$0xf] %vm747, %v724
    %758 = vst.msk [vmem:[%s5 + $0x28] sm:$0xf] %vm747, %v725
    %759 = vst.msk [vmem:[%s5 + $0x2c] sm:$0xf] %vm747, %v726
    %760 = vst.msk [vmem:[%s5 + $0x30] sm:$0xf] %vm747, %v727
    %761 = vst.msk [vmem:[%s5 + $0x34] sm:$0xf] %vm747, %v728
    %762 = vst.msk [vmem:[%s5 + $0x38] sm:$0xf] %vm747, %v729
    %763 = vst.msk [vmem:[%s5 + $0x3c] sm:$0xf] %vm747, %v730
  $region29: #{vgae_forward.4} parent=0 // pred_fallthru
    _
  // Predicated region
  $region30: #{vgae_forward.4} parent=0 // pred_check
    _
  $region31: #{vgae_forward.4} parent=0 // pred_check_branch
    %765 = sbr.rel (0) target = $region33
  $region32: #{vgae_forward.4} parent=0 // pred_region
    _
  $region33: #{vgae_forward.4} parent=0 // pred_fallthru
    _
  // Predicated region
  $region34: #{vgae_forward.4} parent=0 // pred_check
    _
  $region35: #{vgae_forward.4} parent=0 // pred_check_branch
    %767 = sbr.rel (0) target = $region37
  $region36: #{vgae_forward.4} parent=0 // pred_region
    _
  $region37: #{vgae_forward.4} parent=0 // pred_fallthru
    _

// kernel: vgae_forward.3
$region0: #{vgae_forward.3}
  #allocation0 [shape = 'u32[]', space=smem, size = 0x4, offset = 0x4, fixed_abs, tag = 'smem constant byte address 0x4 - core index']
  #allocation1 [shape = 'u32[144,128]{1,0:T(1,128)}', space=vmem, size = 0x12000, scoped, tag = 'internal scratch']
  #allocation2 [shape = 'f32[128,8]{1,0:T(8,128)}', space=vmem, size = 0x10000, scoped, tag = 'scratch operand']
  %s0 = inlined_call_operand.vmem [shape: bf16[128,128], index: 0, kind: input, shape index: {}]
  %s1 = inlined_call_operand.vmem [shape: bf16[128,8], index: 1, kind: input, shape index: {}]
  %s2 = inlined_call_operand.vmem [shape: f32[8,32], index: 2, kind: input, shape index: {}]
  %s3 = inlined_call_operand.vmem [shape: f32[1,32], index: 3, kind: input, shape index: {}]
  %s4 = inlined_call_operand.vmem [shape: bf16[128,32], index: 4, kind: output, shape index: {}]
  %s5 = sld [smem:[#allocation0]]
  $region34: #{vgae_forward.3} parent=0
    _
  %s7 = ssub.s32 1, %s5
  %s8 = scalar_select 0, %s7, %s5
  // Predicated region
  $region2: #{vgae_forward.3} parent=0 // pred_check
    _
  $region3: #{vgae_forward.3} parent=0 // pred_check_branch
    %10 = sbr.rel (0) target = $region5
  $region4: #{vgae_forward.3} parent=0 // pred_region
    _
  $region5: #{vgae_forward.3} parent=0 // pred_fallthru
    _
  // Predicated region
  $region6: #{vgae_forward.3} parent=0 // pred_check
    _
  $region7: #{vgae_forward.3} parent=0 // pred_check_branch
    %12 = sbr.rel (0) target = $region9
  $region8: #{vgae_forward.3} parent=0 // pred_region
    _
  $region9: #{vgae_forward.3} parent=0 // pred_fallthru
    _
  // Predicated region
  $region10: #{vgae_forward.3} parent=0 // pred_check
    _
  $region11: #{vgae_forward.3} parent=0 // pred_check_branch
    %14 = sbr.rel (0) target = $region13
  $region12: #{vgae_forward.3} parent=0 // pred_region
    _
  $region13: #{vgae_forward.3} parent=0 // pred_fallthru
    _
  // Predicated region
  $region14: #{vgae_forward.3} parent=0 // pred_check
    _
  $region15: #{vgae_forward.3} parent=0 // pred_check_branch
    %16 = sbr.rel (0) target = $region17
  $region16: #{vgae_forward.3} parent=0 // pred_region
    _
  $region17: #{vgae_forward.3} parent=0 // pred_fallthru
    _
  %p18 = scmp.eq.s32.totalorder 0, 0
  // Predicated region
  $region18: #{vgae_forward.3} parent=0 // pred_check
    %p19 = pneg %p18
  $region19: #{vgae_forward.3} parent=0 // pred_check_branch
    %21 = sbr.rel (%p19) target = $region21
  $region20: #{vgae_forward.3} parent=0 // pred_region
    %vm22 = vcmask 64512
    %23 = vst.msk [vmem:[#allocation2] sm:$0xff] %vm22, 0.0
    %24 = vst.msk [vmem:[#allocation2 + $0x8] sm:$0xff] %vm22, 0.0
    %25 = vst.msk [vmem:[#allocation2 + $0x10] sm:$0xff] %vm22, 0.0
    %26 = vst.msk [vmem:[#allocation2 + $0x18] sm:$0xff] %vm22, 0.0
    %27 = vst.msk [vmem:[#allocation2 + $0x20] sm:$0xff] %vm22, 0.0
    %28 = vst.msk [vmem:[#allocation2 + $0x28] sm:$0xff] %vm22, 0.0
    %29 = vst.msk [vmem:[#allocation2 + $0x30] sm:$0xff] %vm22, 0.0
    %30 = vst.msk [vmem:[#allocation2 + $0x38] sm:$0xff] %vm22, 0.0
    %31 = vst.msk [vmem:[#allocation2 + $0x40] sm:$0xff] %vm22, 0.0
    %32 = vst.msk [vmem:[#allocation2 + $0x48] sm:$0xff] %vm22, 0.0
    %33 = vst.msk [vmem:[#allocation2 + $0x50] sm:$0xff] %vm22, 0.0
    %34 = vst.msk [vmem:[#allocation2 + $0x58] sm:$0xff] %vm22, 0.0
    %35 = vst.msk [vmem:[#allocation2 + $0x60] sm:$0xff] %vm22, 0.0
    %36 = vst.msk [vmem:[#allocation2 + $0x68] sm:$0xff] %vm22, 0.0
    %37 = vst.msk [vmem:[#allocation2 + $0x70] sm:$0xff] %vm22, 0.0
    %38 = vst.msk [vmem:[#allocation2 + $0x78] sm:$0xff] %vm22, 0.0
  $region21: #{vgae_forward.3} parent=0 // pred_fallthru
    _
  %v39 = vld [vmem:[#allocation2] sm:$0xff]
  %v40 = vld [vmem:[#allocation2 + $0x8] sm:$0xff]
  %v41 = vld [vmem:[#allocation2 + $0x10] sm:$0xff]
  %v42 = vld [vmem:[#allocation2 + $0x18] sm:$0xff]
  %v43 = vld [vmem:[#allocation2 + $0x20] sm:$0xff]
  %v44 = vld [vmem:[#allocation2 + $0x28] sm:$0xff]
  %v45 = vld [vmem:[#allocation2 + $0x30] sm:$0xff]
  %v46 = vld [vmem:[#allocation2 + $0x38] sm:$0xff]
  %v47 = vld [vmem:[#allocation2 + $0x40] sm:$0xff]
  %v48 = vld [vmem:[#allocation2 + $0x48] sm:$0xff]
  %v49 = vld [vmem:[#allocation2 + $0x50] sm:$0xff]
  %v50 = vld [vmem:[#allocation2 + $0x58] sm:$0xff]
  %v51 = vld [vmem:[#allocation2 + $0x60] sm:$0xff]
  %v52 = vld [vmem:[#allocation2 + $0x68] sm:$0xff]
  %v53 = vld [vmem:[#allocation2 + $0x70] sm:$0xff]
  %v54 = vld [vmem:[#allocation2 + $0x78] sm:$0xff]
  %v55 = vld [vmem:[%s0] sm:$0xf]
  %v56 = vld [vmem:[%s0 + $0x4] sm:$0xf]
  %v57 = vld [vmem:[%s0 + $0x8] sm:$0xf]
  %v58 = vld [vmem:[%s0 + $0xc] sm:$0xf]
  %v59 = vld [vmem:[%s0 + $0x10] sm:$0xf]
  %v60 = vld [vmem:[%s0 + $0x14] sm:$0xf]
  %v61 = vld [vmem:[%s0 + $0x18] sm:$0xf]
  %v62 = vld [vmem:[%s0 + $0x1c] sm:$0xf]
  %v63 = vld [vmem:[%s0 + $0x20] sm:$0xf]
  %v64 = vld [vmem:[%s0 + $0x24] sm:$0xf]
  %v65 = vld [vmem:[%s0 + $0x28] sm:$0xf]
  %v66 = vld [vmem:[%s0 + $0x2c] sm:$0xf]
  %v67 = vld [vmem:[%s0 + $0x30] sm:$0xf]
  %v68 = vld [vmem:[%s0 + $0x34] sm:$0xf]
  %v69 = vld [vmem:[%s0 + $0x38] sm:$0xf]
  %v70 = vld [vmem:[%s0 + $0x3c] sm:$0xf]
  %v71 = vld [vmem:[%s1] sm:$0xf]
  %v72 = vld [vmem:[%s1 + $0x4] sm:$0xf]
  %v73 = vld [vmem:[%s1 + $0x8] sm:$0xf]
  %v74 = vld [vmem:[%s1 + $0xc] sm:$0xf]
  %v75 = vld [vmem:[%s1 + $0x10] sm:$0xf]
  %v76 = vld [vmem:[%s1 + $0x14] sm:$0xf]
  %v77 = vld [vmem:[%s1 + $0x18] sm:$0xf]
  %v78 = vld [vmem:[%s1 + $0x1c] sm:$0xf]
  %v79 = vld [vmem:[%s1 + $0x20] sm:$0xf]
  %v80 = vld [vmem:[%s1 + $0x24] sm:$0xf]
  %v81 = vld [vmem:[%s1 + $0x28] sm:$0xf]
  %v82 = vld [vmem:[%s1 + $0x2c] sm:$0xf]
  %v83 = vld [vmem:[%s1 + $0x30] sm:$0xf]
  %v84 = vld [vmem:[%s1 + $0x34] sm:$0xf]
  %v85 = vld [vmem:[%s1 + $0x38] sm:$0xf]
  %v86 = vld [vmem:[%s1 + $0x3c] sm:$0xf]
  %v103 = vunpack.c.l.b16 %v55
  %v104 = vunpack.c.l.b16 %v56
  %v105 = vunpack.c.l.b16 %v57
  %v106 = vunpack.c.l.b16 %v58
  %v107 = vunpack.c.l.b16 %v59
  %v108 = vunpack.c.l.b16 %v60
  %v109 = vunpack.c.l.b16 %v61
  %v110 = vunpack.c.l.b16 %v62
  %v111 = vunpack.c.l.b16 %v63
  %v112 = vunpack.c.l.b16 %v64
  %v113 = vunpack.c.l.b16 %v65
  %v114 = vunpack.c.l.b16 %v66
  %v115 = vunpack.c.l.b16 %v67
  %v116 = vunpack.c.l.b16 %v68
  %v117 = vunpack.c.l.b16 %v69
  %v118 = vunpack.c.l.b16 %v70
  %v119 = vpack.c.b16 %v104, %v103
  %v120 = vpack.c.b16 %v106, %v105
  %v121 = vpack.c.b16 %v108, %v107
  %v122 = vpack.c.b16 %v110, %v109
  %v123 = vpack.c.b16 %v112, %v111
  %v124 = vpack.c.b16 %v114, %v113
  %v125 = vpack.c.b16 %v116, %v115
  %v126 = vpack.c.b16 %v118, %v117
  %v151 = vunpack.c.l.b16 %v71
  %v152 = vunpack.c.l.b16 %v72
  %v153 = vunpack.c.l.b16 %v73
  %v154 = vunpack.c.l.b16 %v74
  %v155 = vunpack.c.l.b16 %v75
  %v156 = vunpack.c.l.b16 %v76
  %v157 = vunpack.c.l.b16 %v77
  %v158 = vunpack.c.l.b16 %v78
  %v159 = vunpack.c.l.b16 %v79
  %v160 = vunpack.c.l.b16 %v80
  %v161 = vunpack.c.l.b16 %v81
  %v162 = vunpack.c.l.b16 %v82
  %v163 = vunpack.c.l.b16 %v83
  %v164 = vunpack.c.l.b16 %v84
  %v165 = vunpack.c.l.b16 %v85
  %v166 = vunpack.c.l.b16 %v86
  %v167 = vpack.c.b16 %v152, %v151
  %v168 = vpack.c.b16 %v154, %v153
  %v169 = vpack.c.b16 %v156, %v155
  %v170 = vpack.c.b16 %v158, %v157
  %v171 = vpack.c.b16 %v160, %v159
  %v172 = vpack.c.b16 %v162, %v161
  %v173 = vpack.c.b16 %v164, %v163
  %v174 = vpack.c.b16 %v166, %v165
  %183 = vmatprep.subr.bf16.mxu0 0
  %184 = vmatpush1.bf16.msra.mxu0 %v174
  %185 = vmatprep.subr.bf16.mxu0 0
  %186 = vmatpush1.bf16.msra.mxu0 %v173
  %187 = vmatprep.subr.bf16.mxu0 0
  %188 = vmatpush1.bf16.msra.mxu0 %v172
  %189 = vmatprep.subr.bf16.mxu0 0
  %190 = vmatpush1.bf16.msra.mxu0 %v171
  %191 = vmatprep.subr.bf16.mxu0 0
  %192 = vmatpush1.bf16.msra.mxu0 %v170
  %193 = vmatprep.subr.bf16.mxu0 0
  %194 = vmatpush1.bf16.msra.mxu0 %v169
  %195 = vmatprep.subr.bf16.mxu0 0
  %196 = vmatpush1.bf16.msra.mxu0 %v168
  %197 = vmatprep.subr.bf16.mxu0 0
  %198 = vmatpush1.bf16.msra.mxu0 %v167
  %199 = vmatprep.subr.bf16.mxu0 0
  %200 = vmatpush2.bf16.msra.mxu0 0
  %201 = vmatprep.subr.bf16.mxu0 0
  %202 = vmatpush2.bf16.msra.mxu0 0
  %203 = vmatprep.subr.bf16.mxu0 0
  %204 = vmatpush2.bf16.msra.mxu0 0
  %205 = vmatprep.subr.bf16.mxu0 0
  %206 = vmatpush2.bf16.msra.mxu0 0
  %207 = vmatprep.subr.bf16.mxu0 0
  %208 = vmatpush2.bf16.msra.mxu0 0
  %209 = vmatprep.subr.bf16.mxu0 0
  %210 = vmatpush2.bf16.msra.mxu0 0
  %211 = vmatprep.subr.bf16.mxu0 0
  %212 = vmatpush2.bf16.msra.mxu0 0
  %213 = vmatprep.subr.bf16.mxu0 0
  %214 = vmatpush2.bf16.msra.mxu0 0
  %215 = vmatprep.mubr.bf16.mxu0 0
  %216 = vmatmul.mubr.bf16.gmra.mxu0 %v119
  %v217 = vpop.f32.mrf.mxu0
  %v218 = vadd.f32 0.0, %v217
  %v219 = vpop.f32.mrf.mxu0
  %v220 = vpop.f32.mrf.mxu0
  %v221 = vadd.f32 0.0, %v220
  %v222 = vpop.f32.mrf.mxu0
  %223 = vmatprep.mubr.bf16.mxu0 0
  %224 = vmatmul.mubr.bf16.gmra.mxu0 %v120
  %v225 = vpop.f32.mrf.mxu0
  %v226 = vadd.f32 0.0, %v225
  %v227 = vpop.f32.mrf.mxu0
  %v228 = vpop.f32.mrf.mxu0
  %v229 = vadd.f32 0.0, %v228
  %v230 = vpop.f32.mrf.mxu0
  %231 = vmatprep.mubr.bf16.mxu0 0
  %232 = vmatmul.mubr.bf16.gmra.mxu0 %v121
  %v233 = vpop.f32.mrf.mxu0
  %v234 = vadd.f32 0.0, %v233
  %v235 = vpop.f32.mrf.mxu0
  %v236 = vpop.f32.mrf.mxu0
  %v237 = vadd.f32 0.0, %v236
  %v238 = vpop.f32.mrf.mxu0
  %239 = vmatprep.mubr.bf16.mxu0 0
  %240 = vmatmul.mubr.bf16.gmra.mxu0 %v122
  %v241 = vpop.f32.mrf.mxu0
  %v242 = vadd.f32 0.0, %v241
  %v243 = vpop.f32.mrf.mxu0
  %v244 = vpop.f32.mrf.mxu0
  %v245 = vadd.f32 0.0, %v244
  %v246 = vpop.f32.mrf.mxu0
  %247 = vmatprep.mubr.bf16.mxu0 0
  %248 = vmatmul.mubr.bf16.gmra.mxu0 %v123
  %v249 = vpop.f32.mrf.mxu0
  %v250 = vadd.f32 0.0, %v249
  %v251 = vpop.f32.mrf.mxu0
  %v252 = vpop.f32.mrf.mxu0
  %v253 = vadd.f32 0.0, %v252
  %v254 = vpop.f32.mrf.mxu0
  %255 = vmatprep.mubr.bf16.mxu0 0
  %256 = vmatmul.mubr.bf16.gmra.mxu0 %v124
  %v257 = vpop.f32.mrf.mxu0
  %v258 = vadd.f32 0.0, %v257
  %v259 = vpop.f32.mrf.mxu0
  %v260 = vpop.f32.mrf.mxu0
  %v261 = vadd.f32 0.0, %v260
  %v262 = vpop.f32.mrf.mxu0
  %263 = vmatprep.mubr.bf16.mxu0 0
  %264 = vmatmul.mubr.bf16.gmra.mxu0 %v125
  %v265 = vpop.f32.mrf.mxu0
  %v266 = vadd.f32 0.0, %v265
  %v267 = vpop.f32.mrf.mxu0
  %v268 = vpop.f32.mrf.mxu0
  %v269 = vadd.f32 0.0, %v268
  %v270 = vpop.f32.mrf.mxu0
  %271 = vmatprep.mubr.bf16.mxu0 0
  %272 = vmatmul.mubr.bf16.gmra.mxu0 %v126
  %v273 = vpop.f32.mrf.mxu0
  %v274 = vadd.f32 0.0, %v273
  %v275 = vpop.f32.mrf.mxu0
  %v276 = vpop.f32.mrf.mxu0
  %v277 = vadd.f32 0.0, %v276
  %v278 = vpop.f32.mrf.mxu0
  %279 = vdwg.mxu0
  %v280 = vadd.f32 %v39, %v218
  %v281 = vadd.f32 %v40, %v221
  %v282 = vadd.f32 %v41, %v226
  %v283 = vadd.f32 %v42, %v229
  %v284 = vadd.f32 %v43, %v234
  %v285 = vadd.f32 %v44, %v237
  %v286 = vadd.f32 %v45, %v242
  %v287 = vadd.f32 %v46, %v245
  %v288 = vadd.f32 %v47, %v250
  %v289 = vadd.f32 %v48, %v253
  %v290 = vadd.f32 %v49, %v258
  %v291 = vadd.f32 %v50, %v261
  %v292 = vadd.f32 %v51, %v266
  %v293 = vadd.f32 %v52, %v269
  %v294 = vadd.f32 %v53, %v274
  %v295 = vadd.f32 %v54, %v277
  %vm296 = vcmask 64512
  %297 = vst.msk [vmem:[#allocation2] sm:$0xff] %vm296, %v280
  %298 = vst.msk [vmem:[#allocation2 + $0x8] sm:$0xff] %vm296, %v281
  %299 = vst.msk [vmem:[#allocation2 + $0x10] sm:$0xff] %vm296, %v282
  %300 = vst.msk [vmem:[#allocation2 + $0x18] sm:$0xff] %vm296, %v283
  %301 = vst.msk [vmem:[#allocation2 + $0x20] sm:$0xff] %vm296, %v284
  %302 = vst.msk [vmem:[#allocation2 + $0x28] sm:$0xff] %vm296, %v285
  %303 = vst.msk [vmem:[#allocation2 + $0x30] sm:$0xff] %vm296, %v286
  %304 = vst.msk [vmem:[#allocation2 + $0x38] sm:$0xff] %vm296, %v287
  %305 = vst.msk [vmem:[#allocation2 + $0x40] sm:$0xff] %vm296, %v288
  %306 = vst.msk [vmem:[#allocation2 + $0x48] sm:$0xff] %vm296, %v289
  %307 = vst.msk [vmem:[#allocation2 + $0x50] sm:$0xff] %vm296, %v290
  %308 = vst.msk [vmem:[#allocation2 + $0x58] sm:$0xff] %vm296, %v291
  %309 = vst.msk [vmem:[#allocation2 + $0x60] sm:$0xff] %vm296, %v292
  %310 = vst.msk [vmem:[#allocation2 + $0x68] sm:$0xff] %vm296, %v293
  %311 = vst.msk [vmem:[#allocation2 + $0x70] sm:$0xff] %vm296, %v294
  %312 = vst.msk [vmem:[#allocation2 + $0x78] sm:$0xff] %vm296, %v295
  // Predicated region
  $region22: #{vgae_forward.3} parent=0 // pred_check
    %p313 = pneg %p18
  $region23: #{vgae_forward.3} parent=0 // pred_check_branch
    %315 = sbr.rel (%p313) target = $region25
  $region24: #{vgae_forward.3} parent=0 // pred_region
    %v316 = vld [vmem:[#allocation2] sm:$0xff]
    %v317 = vld [vmem:[#allocation2 + $0x8] sm:$0xff]
    %v318 = vld [vmem:[#allocation2 + $0x10] sm:$0xff]
    %v319 = vld [vmem:[#allocation2 + $0x18] sm:$0xff]
    %v320 = vld [vmem:[#allocation2 + $0x20] sm:$0xff]
    %v321 = vld [vmem:[#allocation2 + $0x28] sm:$0xff]
    %v322 = vld [vmem:[#allocation2 + $0x30] sm:$0xff]
    %v323 = vld [vmem:[#allocation2 + $0x38] sm:$0xff]
    %v324 = vld [vmem:[#allocation2 + $0x40] sm:$0xff]
    %v325 = vld [vmem:[#allocation2 + $0x48] sm:$0xff]
    %v326 = vld [vmem:[#allocation2 + $0x50] sm:$0xff]
    %v327 = vld [vmem:[#allocation2 + $0x58] sm:$0xff]
    %v328 = vld [vmem:[#allocation2 + $0x60] sm:$0xff]
    %v329 = vld [vmem:[#allocation2 + $0x68] sm:$0xff]
    %v330 = vld [vmem:[#allocation2 + $0x70] sm:$0xff]
    %v331 = vld [vmem:[#allocation2 + $0x78] sm:$0xff]
    %v332 = vld [vmem:[%s2] sm:$0xff]
    %v333 = vld [vmem:[%s3] sm:$0x1]
    %v335 = vlaneseq
    %v336 = vshrl.u32 %v335, 7
    %v337 = vsub.s32 0, %v336
    %v338 = vrot.slane %v333, %v337
    %v341 = vsel %vm296, %v316, 0
    %v344 = vsel %vm296, %v317, 0
    %v347 = vsel %vm296, %v318, 0
    %v350 = vsel %vm296, %v319, 0
    %v353 = vsel %vm296, %v320, 0
    %v356 = vsel %vm296, %v321, 0
    %v359 = vsel %vm296, %v322, 0
    %v362 = vsel %vm296, %v323, 0
    %v365 = vsel %vm296, %v324, 0
    %v368 = vsel %vm296, %v325, 0
    %v371 = vsel %vm296, %v326, 0
    %v374 = vsel %vm296, %v327, 0
    %v377 = vsel %vm296, %v328, 0
    %v380 = vsel %vm296, %v329, 0
    %v383 = vsel %vm296, %v330, 0
    %v386 = vsel %vm296, %v331, 0
    %388 = vmatprep.subr.mxu0 0.0
    %389 = vmatpush1.msra.mxu0 0.0
    %390 = vmatprep.subr.mxu0 0.0
    %391 = vmatpush1.msra.mxu0 0.0
    %392 = vmatprep.subr.mxu0 0.0
    %393 = vmatpush1.msra.mxu0 0.0
    %394 = vmatprep.subr.mxu0 0.0
    %395 = vmatpush1.msra.mxu0 0.0
    %396 = vmatprep.subr.mxu0 0.0
    %397 = vmatpush1.msra.mxu0 0.0
    %398 = vmatprep.subr.mxu0 0.0
    %399 = vmatpush1.msra.mxu0 0.0
    %400 = vmatprep.subr.mxu0 0.0
    %401 = vmatpush1.msra.mxu0 0.0
    %402 = vmatprep.subr.mxu0 0.0
    %403 = vmatpush1.msra.mxu0 0.0
    %404 = vmatprep.subr.mxu0 0.0
    %405 = vmatpush1.msra.mxu0 0.0
    %406 = vmatprep.subr.mxu0 0.0
    %407 = vmatpush1.msra.mxu0 0.0
    %408 = vmatprep.subr.mxu0 0.0
    %409 = vmatpush1.msra.mxu0 0.0
    %410 = vmatprep.subr.mxu0 0.0
    %411 = vmatpush1.msra.mxu0 0.0
    %412 = vmatprep.subr.mxu0 0.0
    %413 = vmatpush1.msra.mxu0 0.0
    %414 = vmatprep.subr.mxu0 0.0
    %415 = vmatpush1.msra.mxu0 0.0
    %416 = vmatprep.subr.mxu0 0.0
    %417 = vmatpush1.msra.mxu0 0.0
    %418 = vmatprep.subr.mxu0 0.0
    %419 = vmatpush1.msra.mxu0 %v332
    %420 = vmatprep.subr.mxu0 0.0
    %421 = vmatpush2.msra.mxu0 0.0
    %422 = vmatprep.subr.mxu0 0.0
    %423 = vmatpush2.msra.mxu0 0.0
    %424 = vmatprep.subr.mxu0 0.0
    %425 = vmatpush2.msra.mxu0 0.0
    %426 = vmatprep.subr.mxu0 0.0
    %427 = vmatpush2.msra.mxu0 0.0
    %428 = vmatprep.subr.mxu0 0.0
    %429 = vmatpush2.msra.mxu0 0.0
    %430 = vmatprep.subr.mxu0 0.0
    %431 = vmatpush2.msra.mxu0 0.0
    %432 = vmatprep.subr.mxu0 0.0
    %433 = vmatpush2.msra.mxu0 0.0
    %434 = vmatprep.subr.mxu0 0.0
    %435 = vmatpush2.msra.mxu0 0.0
    %436 = vmatprep.subr.mxu0 0.0
    %437 = vmatpush2.msra.mxu0 0.0
    %438 = vmatprep.subr.mxu0 0.0
    %439 = vmatpush2.msra.mxu0 0.0
    %440 = vmatprep.subr.mxu0 0.0
    %441 = vmatpush2.msra.mxu0 0.0
    %442 = vmatprep.subr.mxu0 0.0
    %443 = vmatpush2.msra.mxu0 0.0
    %444 = vmatprep.subr.mxu0 0.0
    %445 = vmatpush2.msra.mxu0 0.0
    %446 = vmatprep.subr.mxu0 0.0
    %447 = vmatpush2.msra.mxu0 0.0
    %448 = vmatprep.subr.mxu0 0.0
    %449 = vmatpush2.msra.mxu0 0.0
    %450 = vmatprep.subr.mxu0 0.0
    %451 = vmatpush2.msra.mxu0 0.0
    %452 = vmatprep.mubr.f32.mxu0 0.0
    %453 = vmatmul.mubr.f32.gmra.mxu0 %v341
    %v454 = vpop.f32.mrf.mxu0
    %v455 = vadd.f32 %v338, %v454
    %v456 = vpop.f32.mrf.mxu0
    %457 = vmatprep.mubr.f32.mxu0 0.0
    %458 = vmatmul.mubr.f32.gmra.mxu0 %v344
    %v459 = vpop.f32.mrf.mxu0
    %v460 = vadd.f32 %v338, %v459
    %v461 = vpop.f32.mrf.mxu0
    %462 = vmatprep.mubr.f32.mxu0 0.0
    %463 = vmatmul.mubr.f32.gmra.mxu0 %v347
    %v464 = vpop.f32.mrf.mxu0
    %v465 = vadd.f32 %v338, %v464
    %v466 = vpop.f32.mrf.mxu0
    %467 = vmatprep.mubr.f32.mxu0 0.0
    %468 = vmatmul.mubr.f32.gmra.mxu0 %v350
    %v469 = vpop.f32.mrf.mxu0
    %v470 = vadd.f32 %v338, %v469
    %v471 = vpop.f32.mrf.mxu0
    %472 = vmatprep.mubr.f32.mxu0 0.0
    %473 = vmatmul.mubr.f32.gmra.mxu0 %v353
    %v474 = vpop.f32.mrf.mxu0
    %v475 = vadd.f32 %v338, %v474
    %v476 = vpop.f32.mrf.mxu0
    %477 = vmatprep.mubr.f32.mxu0 0.0
    %478 = vmatmul.mubr.f32.gmra.mxu0 %v356
    %v479 = vpop.f32.mrf.mxu0
    %v480 = vadd.f32 %v338, %v479
    %v481 = vpop.f32.mrf.mxu0
    %482 = vmatprep.mubr.f32.mxu0 0.0
    %483 = vmatmul.mubr.f32.gmra.mxu0 %v359
    %v484 = vpop.f32.mrf.mxu0
    %v485 = vadd.f32 %v338, %v484
    %v486 = vpop.f32.mrf.mxu0
    %487 = vmatprep.mubr.f32.mxu0 0.0
    %488 = vmatmul.mubr.f32.gmra.mxu0 %v362
    %v489 = vpop.f32.mrf.mxu0
    %v490 = vadd.f32 %v338, %v489
    %v491 = vpop.f32.mrf.mxu0
    %492 = vmatprep.mubr.f32.mxu0 0.0
    %493 = vmatmul.mubr.f32.gmra.mxu0 %v365
    %v494 = vpop.f32.mrf.mxu0
    %v495 = vadd.f32 %v338, %v494
    %v496 = vpop.f32.mrf.mxu0
    %497 = vmatprep.mubr.f32.mxu0 0.0
    %498 = vmatmul.mubr.f32.gmra.mxu0 %v368
    %v499 = vpop.f32.mrf.mxu0
    %v500 = vadd.f32 %v338, %v499
    %v501 = vpop.f32.mrf.mxu0
    %502 = vmatprep.mubr.f32.mxu0 0.0
    %503 = vmatmul.mubr.f32.gmra.mxu0 %v371
    %v504 = vpop.f32.mrf.mxu0
    %v505 = vadd.f32 %v338, %v504
    %v506 = vpop.f32.mrf.mxu0
    %507 = vmatprep.mubr.f32.mxu0 0.0
    %508 = vmatmul.mubr.f32.gmra.mxu0 %v374
    %v509 = vpop.f32.mrf.mxu0
    %v510 = vadd.f32 %v338, %v509
    %v511 = vpop.f32.mrf.mxu0
    %512 = vmatprep.mubr.f32.mxu0 0.0
    %513 = vmatmul.mubr.f32.gmra.mxu0 %v377
    %v514 = vpop.f32.mrf.mxu0
    %v515 = vadd.f32 %v338, %v514
    %v516 = vpop.f32.mrf.mxu0
    %517 = vmatprep.mubr.f32.mxu0 0.0
    %518 = vmatmul.mubr.f32.gmra.mxu0 %v380
    %v519 = vpop.f32.mrf.mxu0
    %v520 = vadd.f32 %v338, %v519
    %v521 = vpop.f32.mrf.mxu0
    %522 = vmatprep.mubr.f32.mxu0 0.0
    %523 = vmatmul.mubr.f32.gmra.mxu0 %v383
    %v524 = vpop.f32.mrf.mxu0
    %v525 = vadd.f32 %v338, %v524
    %v526 = vpop.f32.mrf.mxu0
    %527 = vmatprep.mubr.f32.mxu0 0.0
    %528 = vmatmul.mubr.f32.gmra.mxu0 %v386
    %v529 = vpop.f32.mrf.mxu0
    %v530 = vadd.f32 %v338, %v529
    %v531 = vpop.f32.mrf.mxu0
    %532 = vdwg.mxu0
    %v533 = vmax.f32 %v455, 0.0
    %v534 = vmax.f32 %v460, 0.0
    %v535 = vmax.f32 %v465, 0.0
    %v536 = vmax.f32 %v470, 0.0
    %v537 = vmax.f32 %v475, 0.0
    %v538 = vmax.f32 %v480, 0.0
    %v539 = vmax.f32 %v485, 0.0
    %v540 = vmax.f32 %v490, 0.0
    %v541 = vmax.f32 %v495, 0.0
    %v542 = vmax.f32 %v500, 0.0
    %v543 = vmax.f32 %v505, 0.0
    %v544 = vmax.f32 %v510, 0.0
    %v545 = vmax.f32 %v515, 0.0
    %v546 = vmax.f32 %v520, 0.0
    %v547 = vmax.f32 %v525, 0.0
    %v548 = vmax.f32 %v530, 0.0
    %v549 = vpack.c.bf16 %v534, %v533
    %v550 = vpack.c.bf16 %v536, %v535
    %v551 = vpack.c.bf16 %v538, %v537
    %v552 = vpack.c.bf16 %v540, %v539
    %v553 = vpack.c.bf16 %v542, %v541
    %v554 = vpack.c.bf16 %v544, %v543
    %v555 = vpack.c.bf16 %v546, %v545
    %v556 = vpack.c.bf16 %v548, %v547
    %v565 = vunpack.c.l.b16 %v549
    %v566 = vunpack.c.h.b16 %v549
    %v567 = vunpack.c.l.b16 %v550
    %v568 = vunpack.c.h.b16 %v550
    %v569 = vunpack.c.l.b16 %v551
    %v570 = vunpack.c.h.b16 %v551
    %v571 = vunpack.c.l.b16 %v552
    %v572 = vunpack.c.h.b16 %v552
    %v573 = vunpack.c.l.b16 %v553
    %v574 = vunpack.c.h.b16 %v553
    %v575 = vunpack.c.l.b16 %v554
    %v576 = vunpack.c.h.b16 %v554
    %v577 = vunpack.c.l.b16 %v555
    %v578 = vunpack.c.h.b16 %v555
    %v579 = vunpack.c.l.b16 %v556
    %v580 = vunpack.c.h.b16 %v556
    %v581 = vpack.c.b16 %v565, %v565
    %v582 = vpack.c.b16 %v566, %v566
    %v583 = vpack.c.b16 %v567, %v567
    %v584 = vpack.c.b16 %v568, %v568
    %v585 = vpack.c.b16 %v569, %v569
    %v586 = vpack.c.b16 %v570, %v570
    %v587 = vpack.c.b16 %v571, %v571
    %v588 = vpack.c.b16 %v572, %v572
    %v589 = vpack.c.b16 %v573, %v573
    %v590 = vpack.c.b16 %v574, %v574
    %v591 = vpack.c.b16 %v575, %v575
    %v592 = vpack.c.b16 %v576, %v576
    %v593 = vpack.c.b16 %v577, %v577
    %v594 = vpack.c.b16 %v578, %v578
    %v595 = vpack.c.b16 %v579, %v579
    %v596 = vpack.c.b16 %v580, %v580
    %vm613 = vcmask 257024
    %614 = vst.msk [vmem:[%s4] sm:$0xf] %vm613, %v581
    %615 = vst.msk [vmem:[%s4 + $0x4] sm:$0xf] %vm613, %v582
    %616 = vst.msk [vmem:[%s4 + $0x8] sm:$0xf] %vm613, %v583
    %617 = vst.msk [vmem:[%s4 + $0xc] sm:$0xf] %vm613, %v584
    %618 = vst.msk [vmem:[%s4 + $0x10] sm:$0xf] %vm613, %v585
    %619 = vst.msk [vmem:[%s4 + $0x14] sm:$0xf] %vm613, %v586
    %620 = vst.msk [vmem:[%s4 + $0x18] sm:$0xf] %vm613, %v587
    %621 = vst.msk [vmem:[%s4 + $0x1c] sm:$0xf] %vm613, %v588
    %622 = vst.msk [vmem:[%s4 + $0x20] sm:$0xf] %vm613, %v589
    %623 = vst.msk [vmem:[%s4 + $0x24] sm:$0xf] %vm613, %v590
    %624 = vst.msk [vmem:[%s4 + $0x28] sm:$0xf] %vm613, %v591
    %625 = vst.msk [vmem:[%s4 + $0x2c] sm:$0xf] %vm613, %v592
    %626 = vst.msk [vmem:[%s4 + $0x30] sm:$0xf] %vm613, %v593
    %627 = vst.msk [vmem:[%s4 + $0x34] sm:$0xf] %vm613, %v594
    %628 = vst.msk [vmem:[%s4 + $0x38] sm:$0xf] %vm613, %v595
    %629 = vst.msk [vmem:[%s4 + $0x3c] sm:$0xf] %vm613, %v596
  $region25: #{vgae_forward.3} parent=0 // pred_fallthru
    _
  // Predicated region
  $region26: #{vgae_forward.3} parent=0 // pred_check
    _
  $region27: #{vgae_forward.3} parent=0 // pred_check_branch
    %631 = sbr.rel (0) target = $region29
  $region28: #{vgae_forward.3} parent=0 // pred_region
    _
  $region29: #{vgae_forward.3} parent=0 // pred_fallthru
    _
  // Predicated region
  $region30: #{vgae_forward.3} parent=0 // pred_check
    _
  $region31: #{vgae_forward.3} parent=0 // pred_check_branch
    %633 = sbr.rel (0) target = $region33
  $region32: #{vgae_forward.3} parent=0 // pred_region
    _
  $region33: #{vgae_forward.3} parent=0 // pred_fallthru
    _

</llo_original>
